<compile_context>
chip_gen: v7x
topology: tpu7x:2x2x1
jax: 0.10.0
libtpu: 0.0.40
codegen_flags: <defaults>
</compile_context>

<pallas_src>
import functools

import jax
import jax.numpy as jnp
from jax import lax
from jax.experimental import pallas as pl
from jax.experimental.pallas import tpu as pltpu


def _img_proj_kernel(x_ref, w_ref, b_ref, g_ref, beta_ref, o_ref, *, n_tok, d_cross):
    # x_ref:    (tm, D_in)            batch tile of image embeddings (weight dtype)
    # w_ref:    (D_in, n_tok*Dc)      weight slab for n_tok extra-context tokens
    # b_ref:    (1, n_tok*Dc)         bias slab for those tokens (f32)
    # g_ref:    (1, Dc)               LayerNorm gamma (f32)
    # beta_ref: (1, Dc)               LayerNorm beta  (f32)
    # o_ref:    (tm, n_tok*Dc)        lane-dense output slab
    y = jnp.dot(x_ref[...], w_ref[...], preferred_element_type=jnp.float32)
    y = y + b_ref[...]                                  # broadcast (1, n_tok*Dc)

    gamma = g_ref[...]
    beta = beta_ref[...]

    # LayerNorm over each token's Dc slice (static unrolled loop, n_tok is tiny).
    for j in range(n_tok):
        yj = y[:, j * d_cross:(j + 1) * d_cross]
        mean = jnp.mean(yj, axis=-1, keepdims=True)
        var = jnp.mean(jnp.square(yj - mean), axis=-1, keepdims=True)
        y_hat = (yj - mean) * lax.rsqrt(var + 1e-5)     # torch LayerNorm eps
        o_ref[:, j * d_cross:(j + 1) * d_cross] = (y_hat * gamma + beta).astype(o_ref.dtype)


def _tpu_env():
    """Best-effort (vmem_capacity_bytes, num_tensorcores, device_kind_lower)."""
    vmem_cap = 128 << 20
    num_tc = 1
    kind = ""
    try:
        kind = (getattr(jax.devices()[0], "device_kind", "") or "").lower()
    except Exception:
        pass
    if "v7" in kind:
        vmem_cap = 64 << 20
        num_tc = 2
    try:
        vmem_cap = int(pltpu.get_tpu_info().vmem_capacity_bytes)
    except Exception:
        pass
    return vmem_cap, num_tc, kind


def image_proj_model(image_embeds, weight_t, bias, ln_gamma, ln_beta, *,
                     clip_extra_context_tokens, cross_attention_dim,
                     weight_dtype=jnp.bfloat16, tokens_per_step=None,
                     batch_tile=None, vmem_budget_bytes=None):
    """image_embeds: (B, D_in); weight_t: (D_in, tokens*D_cross) (Linear weight
    transposed); bias: (tokens*D_cross,); ln_gamma/ln_beta: (D_cross,).
    Returns (B, tokens, D_cross)."""
    B, D_in = image_embeds.shape
    T = clip_extra_context_tokens
    Dc = cross_attention_dim
    out_dtype = image_embeds.dtype

    vmem_cap, num_tc, kind = _tpu_env()

    # --- parameter layout / dtype plumbing (plain JAX, free) ----------------
    w = weight_t.astype(weight_dtype)                  # halve HBM bytes for the big read
    bias_row = bias.reshape(1, T * Dc).astype(jnp.float32)
    gamma2d = ln_gamma.reshape(1, Dc).astype(jnp.float32)
    beta2d = ln_beta.reshape(1, Dc).astype(jnp.float32)

    # Pre-cast x to the MXU input dtype once in the wrapper (not per grid step).
    x = image_embeds.astype(weight_dtype)

    # --- batch tiling --------------------------------------------------------
    if batch_tile is None:
        tm_target = 128 if ("v5e" in kind or "v5 lite" in kind) else 256
    else:
        tm_target = batch_tile
    tm_target = max(8, (int(tm_target) // 8) * 8)
    B_pad8 = ((B + 7) // 8) * 8
    if B_pad8 <= tm_target:
        tm = B_pad8
        B_pad = B_pad8
    else:
        tm = tm_target
        B_pad = ((B + tm - 1) // tm) * tm
    n_b_tiles = B_pad // tm
    if B_pad != B:
        x = jnp.pad(x, ((0, B_pad - B), (0, 0)))

    # --- choose tokens per grid step so double-buffered W tiles fit budget ---
    w_item = jnp.dtype(weight_dtype).itemsize
    if vmem_budget_bytes is None:
        # ~51 MiB on 128 MiB parts (v5e/v6e), ~20 MiB on 64 MiB parts (v7x).
        vmem_budget_bytes = (int(0.40 * vmem_cap) if vmem_cap >= (96 << 20)
                             else int(0.32 * vmem_cap))
    if tokens_per_step is None:
        # Keep >= num_tc grid steps so both v7x TensorCores get work, unless the
        # batch axis already provides the parallelism.
        max_tok = T
        if num_tc > 1 and n_b_tiles < num_tc and T >= num_tc:
            max_tok = T // num_tc
        tokens_per_step = 1
        for n in range(max_tok, 0, -1):
            if T % n == 0 and 2 * D_in * n * Dc * w_item <= vmem_budget_bytes:
                tokens_per_step = n
                break
    n_tok = tokens_per_step
    assert T % n_tok == 0
    n_steps = T // n_tok

    # --- scoped-VMEM limit: per-spec buffer_count x block bytes + headroom ---
    x_item = jnp.dtype(x.dtype).itemsize
    out_item = jnp.dtype(out_dtype).itemsize
    block_bytes = (2 * tm * D_in * x_item                  # x tile (<=2 buffers)
                   + 2 * D_in * n_tok * Dc * w_item        # W tile (<=2 buffers)
                   + 2 * n_tok * Dc * 4                    # bias tile
                   + 2 * 2 * Dc * 4                        # gamma + beta
                   + 2 * tm * n_tok * Dc * out_item        # output tile
                   + 2 * tm * n_tok * Dc * 4)              # f32 matmul/LN intermediates
    vmem_limit = max(block_bytes + (4 << 20), 16 << 20)
    vmem_limit = int(min(vmem_limit, int(0.75 * vmem_cap)))  # never exceed physical VMEM

    cost = pl.CostEstimate(
        flops=2 * B_pad * D_in * T * Dc,
        transcendentals=B_pad * T,
        bytes_accessed=(n_steps * x.nbytes + w.nbytes + bias_row.nbytes
                        + gamma2d.nbytes + beta2d.nbytes
                        + B_pad * T * Dc * out_item),
    )

    kernel = functools.partial(_img_proj_kernel, n_tok=n_tok, d_cross=Dc)

    def _run(use_single_buffer):
        def spec(shape, imap, single):
            if use_single_buffer and single:
                return pl.BlockSpec(shape, imap, pipeline_mode=pl.Buffered(1))
            return pl.BlockSpec(shape, imap)

        in_specs = [
            spec((tm, D_in), lambda t, b: (b, 0), n_b_tiles == 1),           # x
            spec((D_in, n_tok * Dc), lambda t, b: (0, t), n_steps == 1),     # W slab
            spec((1, n_tok * Dc), lambda t, b: (0, t), n_steps == 1),        # bias slab
            spec((1, Dc), lambda t, b: (0, 0), True),                        # gamma
            spec((1, Dc), lambda t, b: (0, 0), True),                        # beta
        ]
        return pl.pallas_call(
            kernel,
            out_shape=jax.ShapeDtypeStruct((B_pad, T * Dc), out_dtype),
            grid_spec=pltpu.PrefetchScalarGridSpec(
                num_scalar_prefetch=0,
                # Token axis OUTER so the W block index is constant across the
                # inner batch loop -> W DMA'd once per token step, reused for
                # every batch tile.
                grid=(n_steps, n_b_tiles),
                in_specs=in_specs,
                out_specs=pl.BlockSpec((tm, n_tok * Dc), lambda t, b: (b, t)),
            ),
            compiler_params=pltpu.CompilerParams(
                dimension_semantics=("parallel", "parallel"),
                vmem_limit_bytes=vmem_limit),
            cost_estimate=cost,
        )(x, w, bias_row, gamma2d, beta2d)

    if hasattr(pl, "Buffered"):
        try:
            out2d = _run(True)
        except Exception:
            # Older/stricter Pallas may reject Buffered(1); plain double-buffered
            # specs are always valid.
            out2d = _run(False)
    else:
        out2d = _run(False)

    return out2d[:B].reshape(B, T, Dc)


def _reference(image_embeds, weight_t, bias, ln_gamma, ln_beta, T, Dc,
               weight_dtype=jnp.float32):
    x = image_embeds.astype(weight_dtype).astype(jnp.float32)
    w = weight_t.astype(weight_dtype).astype(jnp.float32)
    y = x @ w + bias
    y = y.reshape(-1, T, Dc)
    mean = jnp.mean(y, axis=-1, keepdims=True)
    var = jnp.mean(jnp.square(y - mean), axis=-1, keepdims=True)
    return (y - mean) / jnp.sqrt(var + 1e-5) * ln_gamma + ln_beta


if __name__ == "__main__":
    # Small shapes consistent with the module (scaled down from 1024/1024/4).
    clip_embeddings_dim = 256     # D_in
    cross_attention_dim = 128     # D_cross
    clip_extra_context_tokens = 4
    out_dim = clip_extra_context_tokens * cross_attention_dim

    key = jax.random.PRNGKey(0)
    k_x, k_w, k_b, k_x2 = jax.random.split(key, 4)

    # nn.Linear stores weight as (out, in); we keep the transposed (in, out) layout.
    weight_t = jax.random.normal(
        k_w, (clip_embeddings_dim, out_dim), dtype=jnp.float32) * 0.02
    bias = jax.random.normal(k_b, (out_dim,), dtype=jnp.float32) * 0.02
    ln_gamma = jnp.ones((cross_attention_dim,), dtype=jnp.float32)   # LayerNorm default
    ln_beta = jnp.zeros((cross_attention_dim,), dtype=jnp.float32)   # LayerNorm default

    # --- case 1: f32 weights, auto-tiling (typically 1 token step) ----------
    B = 8
    image_embeds = jax.random.normal(k_x, (B, clip_embeddings_dim), dtype=jnp.float32)
    out_f32 = image_proj_model(
        image_embeds, weight_t, bias, ln_gamma, ln_beta,
        clip_extra_context_tokens=clip_extra_context_tokens,
        cross_attention_dim=cross_attention_dim,
        weight_dtype=jnp.float32)
    out_f32 = jax.block_until_ready(out_f32)
    ref_f32 = _reference(image_embeds, weight_t, bias, ln_gamma, ln_beta,
                         clip_extra_context_tokens, cross_attention_dim,
                         weight_dtype=jnp.float32)
    assert out_f32.shape == (B, clip_extra_context_tokens, cross_attention_dim)
    assert jnp.allclose(out_f32, ref_f32, atol=1e-4, rtol=1e-4)

    # --- case 2: bf16 weights (default, HBM-bandwidth-optimal), auto-tiling --
    out_bf16 = image_proj_model(
        image_embeds, weight_t, bias, ln_gamma, ln_beta,
        clip_extra_context_tokens=clip_extra_context_tokens,
        cross_attention_dim=cross_attention_dim,
        weight_dtype=jnp.bfloat16)
    out_bf16 = jax.block_until_ready(out_bf16)
    ref_bf16 = _reference(image_embeds, weight_t, bias, ln_gamma, ln_beta,
                          clip_extra_context_tokens, cross_attention_dim,
                          weight_dtype=jnp.bfloat16)
    assert out_bf16.shape == (B, clip_extra_context_tokens, cross_attention_dim)
    assert jnp.allclose(out_bf16, ref_bf16, atol=3e-2, rtol=3e-2)

    # --- case 3: exercise the 2-D grid (multiple token steps + batch tiles) --
    B2 = 20
    image_embeds2 = jax.random.normal(k_x2, (B2, clip_embeddings_dim), dtype=jnp.float32)
    out_tiled = image_proj_model(
        image_embeds2, weight_t, bias, ln_gamma, ln_beta,
        clip_extra_context_tokens=clip_extra_context_tokens,
        cross_attention_dim=cross_attention_dim,
        weight_dtype=jnp.bfloat16,
        tokens_per_step=2, batch_tile=8)
    out_tiled = jax.block_until_ready(out_tiled)
    ref_tiled = _reference(image_embeds2, weight_t, bias, ln_gamma, ln_beta,
                           clip_extra_context_tokens, cross_attention_dim,
                           weight_dtype=jnp.bfloat16)
    assert out_tiled.shape == (B2, clip_extra_context_tokens, cross_attention_dim)
    assert jnp.allclose(out_tiled, ref_tiled, atol=3e-2, rtol=3e-2)

    print("KERNEL_OK")
</pallas_src>

<mosaic_0001>
module attributes {stable_mosaic.version = 11 : i64} {
  func.func @_img_proj_kernel(%arg0: i32, %arg1: i32, %arg2: memref<8x256xf32, #tpu.memory_space<vmem>>, %arg3: memref<256x512xf32, #tpu.memory_space<vmem>>, %arg4: memref<1x512xf32, #tpu.memory_space<vmem>>, %arg5: memref<1x128xf32, #tpu.memory_space<vmem>>, %arg6: memref<1x128xf32, #tpu.memory_space<vmem>>, %arg7: memref<8x512xf32, #tpu.memory_space<vmem>>) attributes {dimension_semantics = [#tpu.dimension_semantics<parallel>, #tpu.dimension_semantics<parallel>], iteration_bounds = array<i64: 1, 1>, scalar_prefetch = 0 : i64, scratch_operands = 0 : i64, tpu.core_type = #tpu.core_type<tc>, window_params = [{pipeline_mode = #tpu.pipeline_mode<synchronous>, transform_indices = @transform_0, window_bounds = array<i64: 8, 256>}, {pipeline_mode = #tpu.pipeline_mode<synchronous>, transform_indices = @transform_1, window_bounds = array<i64: 256, 512>}, {pipeline_mode = #tpu.pipeline_mode<synchronous>, transform_indices = @transform_2, window_bounds = array<i64: 1, 512>}, {pipeline_mode = #tpu.pipeline_mode<synchronous>, transform_indices = @transform_3, window_bounds = array<i64: 1, 128>}, {pipeline_mode = #tpu.pipeline_mode<synchronous>, transform_indices = @transform_4, window_bounds = array<i64: 1, 128>}, {transform_indices = @transform_5, window_bounds = array<i64: 8, 512>}]} {
    %c0 = arith.constant 0 : index
    %c0_0 = arith.constant 0 : index
    %0 = vector.load %arg2[%c0, %c0_0] : memref<8x256xf32, #tpu.memory_space<vmem>>, vector<8x256xf32>
    %c0_1 = arith.constant 0 : index
    %c0_2 = arith.constant 0 : index
    %1 = vector.load %arg3[%c0_1, %c0_2] : memref<256x512xf32, #tpu.memory_space<vmem>>, vector<256x512xf32>
    %cst = arith.constant dense<0.000000e+00> : vector<8x512xf32>
    %2 = tpu.matmul %0, %1, %cst {dimension_numbers = #tpu.dot_dimension_numbers<[1], [0], [0], [1], [0, 0, 1, 1], [], []>} : vector<8x256xf32>, vector<256x512xf32>, vector<8x512xf32> -> vector<8x512xf32>
    %c0_3 = arith.constant 0 : index
    %c0_4 = arith.constant 0 : index
    %3 = vector.load %arg4[%c0_3, %c0_4] : memref<1x512xf32, #tpu.memory_space<vmem>>, vector<1x512xf32>
    %4 = vector.broadcast %3 : vector<1x512xf32> to vector<8x512xf32>
    %5 = arith.addf %2, %4 : vector<8x512xf32>
    %c0_5 = arith.constant 0 : index
    %c0_6 = arith.constant 0 : index
    %6 = vector.load %arg5[%c0_5, %c0_6] : memref<1x128xf32, #tpu.memory_space<vmem>>, vector<1x128xf32>
    %c0_7 = arith.constant 0 : index
    %c0_8 = arith.constant 0 : index
    %7 = vector.load %arg6[%c0_7, %c0_8] : memref<1x128xf32, #tpu.memory_space<vmem>>, vector<1x128xf32>
    %8 = vector.extract_strided_slice %5 {offsets = [0, 0], sizes = [8, 128], strides = [1, 1]} : vector<8x512xf32> to vector<8x128xf32>
    %cst_9 = arith.constant dense<0.000000e+00> : vector<8xf32>
    %9 = vector.multi_reduction <add>, %8, %cst_9 [1] : vector<8x128xf32> to vector<8xf32>
    %10 = vector.shape_cast %9 : vector<8xf32> to vector<8x1xf32>
    %cst_10 = arith.constant 1.280000e+02 : f32
    %11 = vector.broadcast %cst_10 : f32 to vector<8x1xf32>
    %12 = arith.divf %10, %11 : vector<8x1xf32>
    %13 = vector.broadcast %12 : vector<8x1xf32> to vector<8x128xf32>
    %14 = arith.subf %8, %13 : vector<8x128xf32>
    %15 = arith.mulf %14, %14 : vector<8x128xf32>
    %cst_11 = arith.constant dense<0.000000e+00> : vector<8xf32>
    %16 = vector.multi_reduction <add>, %15, %cst_11 [1] : vector<8x128xf32> to vector<8xf32>
    %17 = vector.shape_cast %16 : vector<8xf32> to vector<8x1xf32>
    %cst_12 = arith.constant 1.280000e+02 : f32
    %18 = vector.broadcast %cst_12 : f32 to vector<8x1xf32>
    %19 = arith.divf %17, %18 : vector<8x1xf32>
    %20 = vector.broadcast %12 : vector<8x1xf32> to vector<8x128xf32>
    %21 = arith.subf %8, %20 : vector<8x128xf32>
    %cst_13 = arith.constant 9.99999974E-6 : f32
    %22 = vector.broadcast %cst_13 : f32 to vector<8x1xf32>
    %23 = arith.addf %19, %22 : vector<8x1xf32>
    %24 = math.rsqrt %23 : vector<8x1xf32>
    %25 = vector.broadcast %24 : vector<8x1xf32> to vector<8x128xf32>
    %26 = arith.mulf %21, %25 : vector<8x128xf32>
    %27 = vector.broadcast %6 : vector<1x128xf32> to vector<8x128xf32>
    %28 = arith.mulf %26, %27 : vector<8x128xf32>
    %29 = vector.broadcast %7 : vector<1x128xf32> to vector<8x128xf32>
    %30 = arith.addf %28, %29 : vector<8x128xf32>
    %c0_14 = arith.constant 0 : index
    %c0_15 = arith.constant 0 : index
    %31 = vector.load %arg7[%c0_14, %c0_15] : memref<8x512xf32, #tpu.memory_space<vmem>>, vector<8x128xf32>
    tpu.vector_store %arg7[%c0_14, %c0_15], %30 {strides = array<i32>} : memref<8x512xf32, #tpu.memory_space<vmem>>, vector<8x128xf32>,
    %32 = vector.extract_strided_slice %5 {offsets = [0, 128], sizes = [8, 128], strides = [1, 1]} : vector<8x512xf32> to vector<8x128xf32>
    %cst_16 = arith.constant dense<0.000000e+00> : vector<8xf32>
    %33 = vector.multi_reduction <add>, %32, %cst_16 [1] : vector<8x128xf32> to vector<8xf32>
    %34 = vector.shape_cast %33 : vector<8xf32> to vector<8x1xf32>
    %cst_17 = arith.constant 1.280000e+02 : f32
    %35 = vector.broadcast %cst_17 : f32 to vector<8x1xf32>
    %36 = arith.divf %34, %35 : vector<8x1xf32>
    %37 = vector.broadcast %36 : vector<8x1xf32> to vector<8x128xf32>
    %38 = arith.subf %32, %37 : vector<8x128xf32>
    %39 = arith.mulf %38, %38 : vector<8x128xf32>
    %cst_18 = arith.constant dense<0.000000e+00> : vector<8xf32>
    %40 = vector.multi_reduction <add>, %39, %cst_18 [1] : vector<8x128xf32> to vector<8xf32>
    %41 = vector.shape_cast %40 : vector<8xf32> to vector<8x1xf32>
    %cst_19 = arith.constant 1.280000e+02 : f32
    %42 = vector.broadcast %cst_19 : f32 to vector<8x1xf32>
    %43 = arith.divf %41, %42 : vector<8x1xf32>
    %44 = vector.broadcast %36 : vector<8x1xf32> to vector<8x128xf32>
    %45 = arith.subf %32, %44 : vector<8x128xf32>
    %cst_20 = arith.constant 9.99999974E-6 : f32
    %46 = vector.broadcast %cst_20 : f32 to vector<8x1xf32>
    %47 = arith.addf %43, %46 : vector<8x1xf32>
    %48 = math.rsqrt %47 : vector<8x1xf32>
    %49 = vector.broadcast %48 : vector<8x1xf32> to vector<8x128xf32>
    %50 = arith.mulf %45, %49 : vector<8x128xf32>
    %51 = vector.broadcast %6 : vector<1x128xf32> to vector<8x128xf32>
    %52 = arith.mulf %50, %51 : vector<8x128xf32>
    %53 = vector.broadcast %7 : vector<1x128xf32> to vector<8x128xf32>
    %54 = arith.addf %52, %53 : vector<8x128xf32>
    %c0_21 = arith.constant 0 : index
    %c128 = arith.constant 128 : index
    %55 = vector.load %arg7[%c0_21, %c128] : memref<8x512xf32, #tpu.memory_space<vmem>>, vector<8x128xf32>
    tpu.vector_store %arg7[%c0_21, %c128], %54 {strides = array<i32>} : memref<8x512xf32, #tpu.memory_space<vmem>>, vector<8x128xf32>,
    %56 = vector.extract_strided_slice %5 {offsets = [0, 256], sizes = [8, 128], strides = [1, 1]} : vector<8x512xf32> to vector<8x128xf32>
    %cst_22 = arith.constant dense<0.000000e+00> : vector<8xf32>
    %57 = vector.multi_reduction <add>, %56, %cst_22 [1] : vector<8x128xf32> to vector<8xf32>
    %58 = vector.shape_cast %57 : vector<8xf32> to vector<8x1xf32>
    %cst_23 = arith.constant 1.280000e+02 : f32
    %59 = vector.broadcast %cst_23 : f32 to vector<8x1xf32>
    %60 = arith.divf %58, %59 : vector<8x1xf32>
    %61 = vector.broadcast %60 : vector<8x1xf32> to vector<8x128xf32>
    %62 = arith.subf %56, %61 : vector<8x128xf32>
    %63 = arith.mulf %62, %62 : vector<8x128xf32>
    %cst_24 = arith.constant dense<0.000000e+00> : vector<8xf32>
    %64 = vector.multi_reduction <add>, %63, %cst_24 [1] : vector<8x128xf32> to vector<8xf32>
    %65 = vector.shape_cast %64 : vector<8xf32> to vector<8x1xf32>
    %cst_25 = arith.constant 1.280000e+02 : f32
    %66 = vector.broadcast %cst_25 : f32 to vector<8x1xf32>
    %67 = arith.divf %65, %66 : vector<8x1xf32>
    %68 = vector.broadcast %60 : vector<8x1xf32> to vector<8x128xf32>
    %69 = arith.subf %56, %68 : vector<8x128xf32>
    %cst_26 = arith.constant 9.99999974E-6 : f32
    %70 = vector.broadcast %cst_26 : f32 to vector<8x1xf32>
    %71 = arith.addf %67, %70 : vector<8x1xf32>
    %72 = math.rsqrt %71 : vector<8x1xf32>
    %73 = vector.broadcast %72 : vector<8x1xf32> to vector<8x128xf32>
    %74 = arith.mulf %69, %73 : vector<8x128xf32>
    %75 = vector.broadcast %6 : vector<1x128xf32> to vector<8x128xf32>
    %76 = arith.mulf %74, %75 : vector<8x128xf32>
    %77 = vector.broadcast %7 : vector<1x128xf32> to vector<8x128xf32>
    %78 = arith.addf %76, %77 : vector<8x128xf32>
    %c0_27 = arith.constant 0 : index
    %c256 = arith.constant 256 : index
    %79 = vector.load %arg7[%c0_27, %c256] : memref<8x512xf32, #tpu.memory_space<vmem>>, vector<8x128xf32>
    tpu.vector_store %arg7[%c0_27, %c256], %78 {strides = array<i32>} : memref<8x512xf32, #tpu.memory_space<vmem>>, vector<8x128xf32>,
    %80 = vector.extract_strided_slice %5 {offsets = [0, 384], sizes = [8, 128], strides = [1, 1]} : vector<8x512xf32> to vector<8x128xf32>
    %cst_28 = arith.constant dense<0.000000e+00> : vector<8xf32>
    %81 = vector.multi_reduction <add>, %80, %cst_28 [1] : vector<8x128xf32> to vector<8xf32>
    %82 = vector.shape_cast %81 : vector<8xf32> to vector<8x1xf32>
    %cst_29 = arith.constant 1.280000e+02 : f32
    %83 = vector.broadcast %cst_29 : f32 to vector<8x1xf32>
    %84 = arith.divf %82, %83 : vector<8x1xf32>
    %85 = vector.broadcast %84 : vector<8x1xf32> to vector<8x128xf32>
    %86 = arith.subf %80, %85 : vector<8x128xf32>
    %87 = arith.mulf %86, %86 : vector<8x128xf32>
    %cst_30 = arith.constant dense<0.000000e+00> : vector<8xf32>
    %88 = vector.multi_reduction <add>, %87, %cst_30 [1] : vector<8x128xf32> to vector<8xf32>
    %89 = vector.shape_cast %88 : vector<8xf32> to vector<8x1xf32>
    %cst_31 = arith.constant 1.280000e+02 : f32
    %90 = vector.broadcast %cst_31 : f32 to vector<8x1xf32>
    %91 = arith.divf %89, %90 : vector<8x1xf32>
    %92 = vector.broadcast %84 : vector<8x1xf32> to vector<8x128xf32>
    %93 = arith.subf %80, %92 : vector<8x128xf32>
    %cst_32 = arith.constant 9.99999974E-6 : f32
    %94 = vector.broadcast %cst_32 : f32 to vector<8x1xf32>
    %95 = arith.addf %91, %94 : vector<8x1xf32>
    %96 = math.rsqrt %95 : vector<8x1xf32>
    %97 = vector.broadcast %96 : vector<8x1xf32> to vector<8x128xf32>
    %98 = arith.mulf %93, %97 : vector<8x128xf32>
    %99 = vector.broadcast %6 : vector<1x128xf32> to vector<8x128xf32>
    %100 = arith.mulf %98, %99 : vector<8x128xf32>
    %101 = vector.broadcast %7 : vector<1x128xf32> to vector<8x128xf32>
    %102 = arith.addf %100, %101 : vector<8x128xf32>
    %c0_33 = arith.constant 0 : index
    %c384 = arith.constant 384 : index
    %103 = vector.load %arg7[%c0_33, %c384] : memref<8x512xf32, #tpu.memory_space<vmem>>, vector<8x128xf32>
    tpu.vector_store %arg7[%c0_33, %c384], %102 {strides = array<i32>} : memref<8x512xf32, #tpu.memory_space<vmem>>, vector<8x128xf32>,
    return
  }
  func.func @transform_0(%arg0: i32, %arg1: i32) -> (i32, i32) {
    %c0_i32 = arith.constant 0 : i32
    %c0_i32_0 = arith.constant 0 : i32
    return %arg1, %c0_i32 : i32, i32
  }
  func.func @transform_1(%arg0: i32, %arg1: i32) -> (i32, i32) {
    %c0_i32 = arith.constant 0 : i32
    %c0_i32_0 = arith.constant 0 : i32
    return %c0_i32, %arg0 : i32, i32
  }
  func.func @transform_2(%arg0: i32, %arg1: i32) -> (i32, i32) {
    %c0_i32 = arith.constant 0 : i32
    %c0_i32_0 = arith.constant 0 : i32
    return %c0_i32, %arg0 : i32, i32
  }
  func.func @transform_3(%arg0: i32, %arg1: i32) -> (i32, i32) {
    %c0_i32 = arith.constant 0 : i32
    %c0_i32_0 = arith.constant 0 : i32
    %c0_i32_1 = arith.constant 0 : i32
    return %c0_i32, %c0_i32_0 : i32, i32
  }
  func.func @transform_4(%arg0: i32, %arg1: i32) -> (i32, i32) {
    %c0_i32 = arith.constant 0 : i32
    %c0_i32_0 = arith.constant 0 : i32
    %c0_i32_1 = arith.constant 0 : i32
    return %c0_i32, %c0_i32_0 : i32, i32
  }
  func.func @transform_5(%arg0: i32, %arg1: i32) -> (i32, i32) {
    %c0_i32 = arith.constant 0 : i32
    return %arg1, %arg0 : i32, i32
  }
}

module attributes {stable_mosaic.version = 11 : i64} {
  func.func @_img_proj_kernel(%arg0: i32, %arg1: i32, %arg2: memref<8x256xf32, #tpu.memory_space<vmem>>, %arg3: memref<256x512xf32, #tpu.memory_space<vmem>>, %arg4: memref<1x512xf32, #tpu.memory_space<vmem>>, %arg5: memref<1x128xf32, #tpu.memory_space<vmem>>, %arg6: memref<1x128xf32, #tpu.memory_space<vmem>>, %arg7: memref<8x512xf32, #tpu.memory_space<vmem>>) attributes {dimension_semantics = [#tpu.dimension_semantics<parallel>, #tpu.dimension_semantics<parallel>], iteration_bounds = array<i64: 1, 1>, scalar_prefetch = 0 : i64, scratch_operands = 0 : i64, tpu.core_type = #tpu.core_type<tc>, window_params = [{transform_indices = @transform_0, window_bounds = array<i64: 8, 256>}, {transform_indices = @transform_1, window_bounds = array<i64: 256, 512>}, {transform_indices = @transform_2, window_bounds = array<i64: 1, 512>}, {pipeline_mode = #tpu.pipeline_mode<synchronous>, transform_indices = @transform_3, window_bounds = array<i64: 1, 128>}, {pipeline_mode = #tpu.pipeline_mode<synchronous>, transform_indices = @transform_4, window_bounds = array<i64: 1, 128>}, {transform_indices = @transform_5, window_bounds = array<i64: 8, 512>}]} {
    %c0 = arith.constant 0 : index
    %c0_0 = arith.constant 0 : index
    %0 = vector.load %arg2[%c0, %c0_0] : memref<8x256xf32, #tpu.memory_space<vmem>>, vector<8x256xf32>
    %c0_1 = arith.constant 0 : index
    %c0_2 = arith.constant 0 : index
    %1 = vector.load %arg3[%c0_1, %c0_2] : memref<256x512xf32, #tpu.memory_space<vmem>>, vector<256x512xf32>
    %cst = arith.constant dense<0.000000e+00> : vector<8x512xf32>
    %2 = tpu.matmul %0, %1, %cst {dimension_numbers = #tpu.dot_dimension_numbers<[1], [0], [0], [1], [0, 0, 1, 1], [], []>} : vector<8x256xf32>, vector<256x512xf32>, vector<8x512xf32> -> vector<8x512xf32>
    %c0_3 = arith.constant 0 : index
    %c0_4 = arith.constant 0 : index
    %3 = vector.load %arg4[%c0_3, %c0_4] : memref<1x512xf32, #tpu.memory_space<vmem>>, vector<1x512xf32>
    %4 = vector.broadcast %3 : vector<1x512xf32> to vector<8x512xf32>
    %5 = arith.addf %2, %4 : vector<8x512xf32>
    %c0_5 = arith.constant 0 : index
    %c0_6 = arith.constant 0 : index
    %6 = vector.load %arg5[%c0_5, %c0_6] : memref<1x128xf32, #tpu.memory_space<vmem>>, vector<1x128xf32>
    %c0_7 = arith.constant 0 : index
    %c0_8 = arith.constant 0 : index
    %7 = vector.load %arg6[%c0_7, %c0_8] : memref<1x128xf32, #tpu.memory_space<vmem>>, vector<1x128xf32>
    %8 = vector.extract_strided_slice %5 {offsets = [0, 0], sizes = [8, 128], strides = [1, 1]} : vector<8x512xf32> to vector<8x128xf32>
    %cst_9 = arith.constant dense<0.000000e+00> : vector<8xf32>
    %9 = vector.multi_reduction <add>, %8, %cst_9 [1] : vector<8x128xf32> to vector<8xf32>
    %10 = vector.shape_cast %9 : vector<8xf32> to vector<8x1xf32>
    %cst_10 = arith.constant 1.280000e+02 : f32
    %11 = vector.broadcast %cst_10 : f32 to vector<8x1xf32>
    %12 = arith.divf %10, %11 : vector<8x1xf32>
    %13 = vector.broadcast %12 : vector<8x1xf32> to vector<8x128xf32>
    %14 = arith.subf %8, %13 : vector<8x128xf32>
    %15 = arith.mulf %14, %14 : vector<8x128xf32>
    %cst_11 = arith.constant dense<0.000000e+00> : vector<8xf32>
    %16 = vector.multi_reduction <add>, %15, %cst_11 [1] : vector<8x128xf32> to vector<8xf32>
    %17 = vector.shape_cast %16 : vector<8xf32> to vector<8x1xf32>
    %cst_12 = arith.constant 1.280000e+02 : f32
    %18 = vector.broadcast %cst_12 : f32 to vector<8x1xf32>
    %19 = arith.divf %17, %18 : vector<8x1xf32>
    %20 = vector.broadcast %12 : vector<8x1xf32> to vector<8x128xf32>
    %21 = arith.subf %8, %20 : vector<8x128xf32>
    %cst_13 = arith.constant 9.99999974E-6 : f32
    %22 = vector.broadcast %cst_13 : f32 to vector<8x1xf32>
    %23 = arith.addf %19, %22 : vector<8x1xf32>
    %24 = math.rsqrt %23 : vector<8x1xf32>
    %25 = vector.broadcast %24 : vector<8x1xf32> to vector<8x128xf32>
    %26 = arith.mulf %21, %25 : vector<8x128xf32>
    %27 = vector.broadcast %6 : vector<1x128xf32> to vector<8x128xf32>
    %28 = arith.mulf %26, %27 : vector<8x128xf32>
    %29 = vector.broadcast %7 : vector<1x128xf32> to vector<8x128xf32>
    %30 = arith.addf %28, %29 : vector<8x128xf32>
    %c0_14 = arith.constant 0 : index
    %c0_15 = arith.constant 0 : index
    %31 = vector.load %arg7[%c0_14, %c0_15] : memref<8x512xf32, #tpu.memory_space<vmem>>, vector<8x128xf32>
    tpu.vector_store %arg7[%c0_14, %c0_15], %30 {strides = array<i32>} : memref<8x512xf32, #tpu.memory_space<vmem>>, vector<8x128xf32>,
    %32 = vector.extract_strided_slice %5 {offsets = [0, 128], sizes = [8, 128], strides = [1, 1]} : vector<8x512xf32> to vector<8x128xf32>
    %cst_16 = arith.constant dense<0.000000e+00> : vector<8xf32>
    %33 = vector.multi_reduction <add>, %32, %cst_16 [1] : vector<8x128xf32> to vector<8xf32>
    %34 = vector.shape_cast %33 : vector<8xf32> to vector<8x1xf32>
    %cst_17 = arith.constant 1.280000e+02 : f32
    %35 = vector.broadcast %cst_17 : f32 to vector<8x1xf32>
    %36 = arith.divf %34, %35 : vector<8x1xf32>
    %37 = vector.broadcast %36 : vector<8x1xf32> to vector<8x128xf32>
    %38 = arith.subf %32, %37 : vector<8x128xf32>
    %39 = arith.mulf %38, %38 : vector<8x128xf32>
    %cst_18 = arith.constant dense<0.000000e+00> : vector<8xf32>
    %40 = vector.multi_reduction <add>, %39, %cst_18 [1] : vector<8x128xf32> to vector<8xf32>
    %41 = vector.shape_cast %40 : vector<8xf32> to vector<8x1xf32>
    %cst_19 = arith.constant 1.280000e+02 : f32
    %42 = vector.broadcast %cst_19 : f32 to vector<8x1xf32>
    %43 = arith.divf %41, %42 : vector<8x1xf32>
    %44 = vector.broadcast %36 : vector<8x1xf32> to vector<8x128xf32>
    %45 = arith.subf %32, %44 : vector<8x128xf32>
    %cst_20 = arith.constant 9.99999974E-6 : f32
    %46 = vector.broadcast %cst_20 : f32 to vector<8x1xf32>
    %47 = arith.addf %43, %46 : vector<8x1xf32>
    %48 = math.rsqrt %47 : vector<8x1xf32>
    %49 = vector.broadcast %48 : vector<8x1xf32> to vector<8x128xf32>
    %50 = arith.mulf %45, %49 : vector<8x128xf32>
    %51 = vector.broadcast %6 : vector<1x128xf32> to vector<8x128xf32>
    %52 = arith.mulf %50, %51 : vector<8x128xf32>
    %53 = vector.broadcast %7 : vector<1x128xf32> to vector<8x128xf32>
    %54 = arith.addf %52, %53 : vector<8x128xf32>
    %c0_21 = arith.constant 0 : index
    %c128 = arith.constant 128 : index
    %55 = vector.load %arg7[%c0_21, %c128] : memref<8x512xf32, #tpu.memory_space<vmem>>, vector<8x128xf32>
    tpu.vector_store %arg7[%c0_21, %c128], %54 {strides = array<i32>} : memref<8x512xf32, #tpu.memory_space<vmem>>, vector<8x128xf32>,
    %56 = vector.extract_strided_slice %5 {offsets = [0, 256], sizes = [8, 128], strides = [1, 1]} : vector<8x512xf32> to vector<8x128xf32>
    %cst_22 = arith.constant dense<0.000000e+00> : vector<8xf32>
    %57 = vector.multi_reduction <add>, %56, %cst_22 [1] : vector<8x128xf32> to vector<8xf32>
    %58 = vector.shape_cast %57 : vector<8xf32> to vector<8x1xf32>
    %cst_23 = arith.constant 1.280000e+02 : f32
    %59 = vector.broadcast %cst_23 : f32 to vector<8x1xf32>
    %60 = arith.divf %58, %59 : vector<8x1xf32>
    %61 = vector.broadcast %60 : vector<8x1xf32> to vector<8x128xf32>
    %62 = arith.subf %56, %61 : vector<8x128xf32>
    %63 = arith.mulf %62, %62 : vector<8x128xf32>
    %cst_24 = arith.constant dense<0.000000e+00> : vector<8xf32>
    %64 = vector.multi_reduction <add>, %63, %cst_24 [1] : vector<8x128xf32> to vector<8xf32>
    %65 = vector.shape_cast %64 : vector<8xf32> to vector<8x1xf32>
    %cst_25 = arith.constant 1.280000e+02 : f32
    %66 = vector.broadcast %cst_25 : f32 to vector<8x1xf32>
    %67 = arith.divf %65, %66 : vector<8x1xf32>
    %68 = vector.broadcast %60 : vector<8x1xf32> to vector<8x128xf32>
    %69 = arith.subf %56, %68 : vector<8x128xf32>
    %cst_26 = arith.constant 9.99999974E-6 : f32
    %70 = vector.broadcast %cst_26 : f32 to vector<8x1xf32>
    %71 = arith.addf %67, %70 : vector<8x1xf32>
    %72 = math.rsqrt %71 : vector<8x1xf32>
    %73 = vector.broadcast %72 : vector<8x1xf32> to vector<8x128xf32>
    %74 = arith.mulf %69, %73 : vector<8x128xf32>
    %75 = vector.broadcast %6 : vector<1x128xf32> to vector<8x128xf32>
    %76 = arith.mulf %74, %75 : vector<8x128xf32>
    %77 = vector.broadcast %7 : vector<1x128xf32> to vector<8x128xf32>
    %78 = arith.addf %76, %77 : vector<8x128xf32>
    %c0_27 = arith.constant 0 : index
    %c256 = arith.constant 256 : index
    %79 = vector.load %arg7[%c0_27, %c256] : memref<8x512xf32, #tpu.memory_space<vmem>>, vector<8x128xf32>
    tpu.vector_store %arg7[%c0_27, %c256], %78 {strides = array<i32>} : memref<8x512xf32, #tpu.memory_space<vmem>>, vector<8x128xf32>,
    %80 = vector.extract_strided_slice %5 {offsets = [0, 384], sizes = [8, 128], strides = [1, 1]} : vector<8x512xf32> to vector<8x128xf32>
    %cst_28 = arith.constant dense<0.000000e+00> : vector<8xf32>
    %81 = vector.multi_reduction <add>, %80, %cst_28 [1] : vector<8x128xf32> to vector<8xf32>
    %82 = vector.shape_cast %81 : vector<8xf32> to vector<8x1xf32>
    %cst_29 = arith.constant 1.280000e+02 : f32
    %83 = vector.broadcast %cst_29 : f32 to vector<8x1xf32>
    %84 = arith.divf %82, %83 : vector<8x1xf32>
    %85 = vector.broadcast %84 : vector<8x1xf32> to vector<8x128xf32>
    %86 = arith.subf %80, %85 : vector<8x128xf32>
    %87 = arith.mulf %86, %86 : vector<8x128xf32>
    %cst_30 = arith.constant dense<0.000000e+00> : vector<8xf32>
    %88 = vector.multi_reduction <add>, %87, %cst_30 [1] : vector<8x128xf32> to vector<8xf32>
    %89 = vector.shape_cast %88 : vector<8xf32> to vector<8x1xf32>
    %cst_31 = arith.constant 1.280000e+02 : f32
    %90 = vector.broadcast %cst_31 : f32 to vector<8x1xf32>
    %91 = arith.divf %89, %90 : vector<8x1xf32>
    %92 = vector.broadcast %84 : vector<8x1xf32> to vector<8x128xf32>
    %93 = arith.subf %80, %92 : vector<8x128xf32>
    %cst_32 = arith.constant 9.99999974E-6 : f32
    %94 = vector.broadcast %cst_32 : f32 to vector<8x1xf32>
    %95 = arith.addf %91, %94 : vector<8x1xf32>
    %96 = math.rsqrt %95 : vector<8x1xf32>
    %97 = vector.broadcast %96 : vector<8x1xf32> to vector<8x128xf32>
    %98 = arith.mulf %93, %97 : vector<8x128xf32>
    %99 = vector.broadcast %6 : vector<1x128xf32> to vector<8x128xf32>
    %100 = arith.mulf %98, %99 : vector<8x128xf32>
    %101 = vector.broadcast %7 : vector<1x128xf32> to vector<8x128xf32>
    %102 = arith.addf %100, %101 : vector<8x128xf32>
    %c0_33 = arith.constant 0 : index
    %c384 = arith.constant 384 : index
    %103 = vector.load %arg7[%c0_33, %c384] : memref<8x512xf32, #tpu.memory_space<vmem>>, vector<8x128xf32>
    tpu.vector_store %arg7[%c0_33, %c384], %102 {strides = array<i32>} : memref<8x512xf32, #tpu.memory_space<vmem>>, vector<8x128xf32>,
    return
  }
  func.func @transform_0(%arg0: i32, %arg1: i32) -> (i32, i32) {
    %c0_i32 = arith.constant 0 : i32
    %c0_i32_0 = arith.constant 0 : i32
    return %arg1, %c0_i32 : i32, i32
  }
  func.func @transform_1(%arg0: i32, %arg1: i32) -> (i32, i32) {
    %c0_i32 = arith.constant 0 : i32
    %c0_i32_0 = arith.constant 0 : i32
    return %c0_i32, %arg0 : i32, i32
  }
  func.func @transform_2(%arg0: i32, %arg1: i32) -> (i32, i32) {
    %c0_i32 = arith.constant 0 : i32
    %c0_i32_0 = arith.constant 0 : i32
    return %c0_i32, %arg0 : i32, i32
  }
  func.func @transform_3(%arg0: i32, %arg1: i32) -> (i32, i32) {
    %c0_i32 = arith.constant 0 : i32
    %c0_i32_0 = arith.constant 0 : i32
    %c0_i32_1 = arith.constant 0 : i32
    return %c0_i32, %c0_i32_0 : i32, i32
  }
  func.func @transform_4(%arg0: i32, %arg1: i32) -> (i32, i32) {
    %c0_i32 = arith.constant 0 : i32
    %c0_i32_0 = arith.constant 0 : i32
    %c0_i32_1 = arith.constant 0 : i32
    return %c0_i32, %c0_i32_0 : i32, i32
  }
  func.func @transform_5(%arg0: i32, %arg1: i32) -> (i32, i32) {
    %c0_i32 = arith.constant 0 : i32
    return %arg1, %arg0 : i32, i32
  }
}

</mosaic_0001>

<llo_original>
// kernel: tpu_custom_call.1
$region0: #{tpu_custom_call.1}
  #allocation0 [shape = 'u32[]', space=smem, size = 0x4, offset = 0x4, fixed_abs, tag = 'smem constant byte address 0x4 - core index']
  #allocation1 [shape = 'u32[144,128]{1,0:T(1,128)}', space=vmem, size = 0x12000, scoped, tag = 'internal scratch']
  %s0 = inlined_call_operand.hbm [shape: f32[8,256], index: 0, kind: input, shape index: {}]
  %s1 = inlined_call_operand.hbm [shape: f32[256,512], index: 1, kind: input, shape index: {}]
  %s2 = inlined_call_operand.vmem [shape: f32[1,512], index: 2, kind: input, shape index: {}]
  %s3 = inlined_call_operand.vmem [shape: f32[1,128], index: 3, kind: input, shape index: {}]
  %s4 = inlined_call_operand.vmem [shape: f32[1,128], index: 4, kind: input, shape index: {}]
  %s5 = inlined_call_operand.hbm [shape: f32[8,512], index: 5, kind: output, shape index: {}]
  %s6 = sld [smem:[#allocation0]]
  $region38: #{tpu_custom_call.1} parent=0
    _
  %s8 = ssub.s32 1, %s6
  %s9 = scalar_select 0, %s8, %s6
  $region1: #{tpu_custom_call.1} parent=0
    #allocation2 [shape = 'u8[8192]{0}', space=vmem, size = 0x2000, scoped, tag = 'input window, operand 0, single buffered']
    #allocation3 [shape = 's32[1]{0}', space=sflag, size = 0x4, scoped, tag = 'scoped memory for tpu_custom_call.1']
    #allocation4 [shape = 's32[1]{0}', space=sflag, size = 0x4, scoped, tag = 'scoped memory for tpu_custom_call.1']
    #allocation5 [shape = 'u8[524288]{0}', space=vmem, size = 0x80000, scoped, tag = 'input window, operand 1, single buffered']
    #allocation6 [shape = 's32[1]{0}', space=sflag, size = 0x4, scoped, tag = 'scoped memory for tpu_custom_call.1']
    #allocation7 [shape = 'u8[16384]{0}', space=vmem, size = 0x4000, scoped, tag = 'output window, operand 0, single buffered']
    %10 = vsyncpa [#allocation3], 0
    %11 = vsyncpa [#allocation6], 0
    %12 = vsyncpa [#allocation4], 0
    // Predicated region
    $region2: #{tpu_custom_call.1} parent=1 // pred_check
      _
    $region3: #{tpu_custom_call.1} parent=1 // pred_check_branch
      %14 = sbr.rel (0) target = $region5
    $region4: #{tpu_custom_call.1} parent=1 // pred_region
      %s16 = ssub.s32 256, 256
      %17 = vsyncadd [#allocation3], %s16
      %s19 = sshll.u32 [#allocation2], 4
      %s20 = int_to_ptr.vmem [resolvable:$true] %s19
      %22 = dma.hbm_to_vmem [thread:$0]  %s0, 256, %s20, [#allocation3]
    $region5: #{tpu_custom_call.1} parent=1 // pred_fallthru
      _
    // Predicated region
    $region6: #{tpu_custom_call.1} parent=1 // pred_check
      _
    $region7: #{tpu_custom_call.1} parent=1 // pred_check_branch
      %24 = sbr.rel (0) target = $region9
    $region8: #{tpu_custom_call.1} parent=1 // pred_region
      %s26 = ssub.s32 16384, 16384
      %27 = vsyncadd [#allocation6], %s26
      %s28 = sshll.u32 [#allocation5], 4
      %s29 = int_to_ptr.vmem [resolvable:$true] %s28
      %34 = dma.hbm_to_vmem [thread:$0]  %s1, 16384, %s29, [#allocation6], 512, 512, 32
    $region9: #{tpu_custom_call.1} parent=1 // pred_fallthru
      _
    // Predicated region
    $region10: #{tpu_custom_call.1} parent=1 // pred_check
      _
    $region11: #{tpu_custom_call.1} parent=1 // pred_check_branch
      %36 = sbr.rel (0) target = $region13
    $region12: #{tpu_custom_call.1} parent=1 // pred_region
      _
    $region13: #{tpu_custom_call.1} parent=1 // pred_fallthru
      _
    // Predicated region
    $region14: #{tpu_custom_call.1} parent=1 // pred_check
      _
    $region15: #{tpu_custom_call.1} parent=1 // pred_check_branch
      %38 = sbr.rel (0) target = $region17
    $region16: #{tpu_custom_call.1} parent=1 // pred_region
      _
    $region17: #{tpu_custom_call.1} parent=1 // pred_fallthru
      _
    // Predicated region
    $region18: #{tpu_custom_call.1} parent=1 // pred_check
      _
    $region19: #{tpu_custom_call.1} parent=1 // pred_check_branch
      %40 = sbr.rel (0) target = $region21
    $region20: #{tpu_custom_call.1} parent=1 // pred_region
      _
    $region21: #{tpu_custom_call.1} parent=1 // pred_fallthru
      _
    // Predicated region
    $region22: #{tpu_custom_call.1} parent=1 // pred_check
      _
    $region23: #{tpu_custom_call.1} parent=1 // pred_check_branch
      %42 = sbr.rel (0) target = $region25
    $region24: #{tpu_custom_call.1} parent=1 // pred_region
      %43 = dma.done [#allocation3], 256
    $region25: #{tpu_custom_call.1} parent=1 // pred_fallthru
      _
    // Predicated region
    $region26: #{tpu_custom_call.1} parent=1 // pred_check
      _
    $region27: #{tpu_custom_call.1} parent=1 // pred_check_branch
      %45 = sbr.rel (0) target = $region29
    $region28: #{tpu_custom_call.1} parent=1 // pred_region
      %46 = dma.done [#allocation6], 16384
    $region29: #{tpu_custom_call.1} parent=1 // pred_fallthru
      _
    %v47 = vld [vmem:[#allocation2] sm:$0xff]
    %v48 = vld [vmem:[#allocation2 + $0x8] sm:$0xff]
    %v49 = vld [vmem:[#allocation5] sm:$0xff]
    %v50 = vld [vmem:[#allocation5 + $0x8] sm:$0xff]
    %v51 = vld [vmem:[#allocation5 + $0x10] sm:$0xff]
    %v52 = vld [vmem:[#allocation5 + $0x18] sm:$0xff]
    %v53 = vld [vmem:[#allocation5 + $0x20] sm:$0xff]
    %v54 = vld [vmem:[#allocation5 + $0x28] sm:$0xff]
    %v55 = vld [vmem:[#allocation5 + $0x30] sm:$0xff]
    %v56 = vld [vmem:[#allocation5 + $0x38] sm:$0xff]
    %v57 = vld [vmem:[#allocation5 + $0x40] sm:$0xff]
    %v58 = vld [vmem:[#allocation5 + $0x48] sm:$0xff]
    %v59 = vld [vmem:[#allocation5 + $0x50] sm:$0xff]
    %v60 = vld [vmem:[#allocation5 + $0x58] sm:$0xff]
    %v61 = vld [vmem:[#allocation5 + $0x60] sm:$0xff]
    %v62 = vld [vmem:[#allocation5 + $0x68] sm:$0xff]
    %v63 = vld [vmem:[#allocation5 + $0x70] sm:$0xff]
    %v64 = vld [vmem:[#allocation5 + $0x78] sm:$0xff]
    %v65 = vld [vmem:[#allocation5 + $0x80] sm:$0xff]
    %v66 = vld [vmem:[#allocation5 + $0x88] sm:$0xff]
    %v67 = vld [vmem:[#allocation5 + $0x90] sm:$0xff]
    %v68 = vld [vmem:[#allocation5 + $0x98] sm:$0xff]
    %v69 = vld [vmem:[#allocation5 + $0xa0] sm:$0xff]
    %v70 = vld [vmem:[#allocation5 + $0xa8] sm:$0xff]
    %v71 = vld [vmem:[#allocation5 + $0xb0] sm:$0xff]
    %v72 = vld [vmem:[#allocation5 + $0xb8] sm:$0xff]
    %v73 = vld [vmem:[#allocation5 + $0xc0] sm:$0xff]
    %v74 = vld [vmem:[#allocation5 + $0xc8] sm:$0xff]
    %v75 = vld [vmem:[#allocation5 + $0xd0] sm:$0xff]
    %v76 = vld [vmem:[#allocation5 + $0xd8] sm:$0xff]
    %v77 = vld [vmem:[#allocation5 + $0xe0] sm:$0xff]
    %v78 = vld [vmem:[#allocation5 + $0xe8] sm:$0xff]
    %v79 = vld [vmem:[#allocation5 + $0xf0] sm:$0xff]
    %v80 = vld [vmem:[#allocation5 + $0xf8] sm:$0xff]
    %v81 = vld [vmem:[#allocation5 + $0x100] sm:$0xff]
    %v82 = vld [vmem:[#allocation5 + $0x108] sm:$0xff]
    %v83 = vld [vmem:[#allocation5 + $0x110] sm:$0xff]
    %v84 = vld [vmem:[#allocation5 + $0x118] sm:$0xff]
    %v85 = vld [vmem:[#allocation5 + $0x120] sm:$0xff]
    %v86 = vld [vmem:[#allocation5 + $0x128] sm:$0xff]
    %v87 = vld [vmem:[#allocation5 + $0x130] sm:$0xff]
    %v88 = vld [vmem:[#allocation5 + $0x138] sm:$0xff]
    %v89 = vld [vmem:[#allocation5 + $0x140] sm:$0xff]
    %v90 = vld [vmem:[#allocation5 + $0x148] sm:$0xff]
    %v91 = vld [vmem:[#allocation5 + $0x150] sm:$0xff]
    %v92 = vld [vmem:[#allocation5 + $0x158] sm:$0xff]
    %v93 = vld [vmem:[#allocation5 + $0x160] sm:$0xff]
    %v94 = vld [vmem:[#allocation5 + $0x168] sm:$0xff]
    %v95 = vld [vmem:[#allocation5 + $0x170] sm:$0xff]
    %v96 = vld [vmem:[#allocation5 + $0x178] sm:$0xff]
    %v97 = vld [vmem:[#allocation5 + $0x180] sm:$0xff]
    %v98 = vld [vmem:[#allocation5 + $0x188] sm:$0xff]
    %v99 = vld [vmem:[#allocation5 + $0x190] sm:$0xff]
    %v100 = vld [vmem:[#allocation5 + $0x198] sm:$0xff]
    %v101 = vld [vmem:[#allocation5 + $0x1a0] sm:$0xff]
    %v102 = vld [vmem:[#allocation5 + $0x1a8] sm:$0xff]
    %v103 = vld [vmem:[#allocation5 + $0x1b0] sm:$0xff]
    %v104 = vld [vmem:[#allocation5 + $0x1b8] sm:$0xff]
    %v105 = vld [vmem:[#allocation5 + $0x1c0] sm:$0xff]
    %v106 = vld [vmem:[#allocation5 + $0x1c8] sm:$0xff]
    %v107 = vld [vmem:[#allocation5 + $0x1d0] sm:$0xff]
    %v108 = vld [vmem:[#allocation5 + $0x1d8] sm:$0xff]
    %v109 = vld [vmem:[#allocation5 + $0x1e0] sm:$0xff]
    %v110 = vld [vmem:[#allocation5 + $0x1e8] sm:$0xff]
    %v111 = vld [vmem:[#allocation5 + $0x1f0] sm:$0xff]
    %v112 = vld [vmem:[#allocation5 + $0x1f8] sm:$0xff]
    %v113 = vld [vmem:[#allocation5 + $0x200] sm:$0xff]
    %v114 = vld [vmem:[#allocation5 + $0x208] sm:$0xff]
    %v115 = vld [vmem:[#allocation5 + $0x210] sm:$0xff]
    %v116 = vld [vmem:[#allocation5 + $0x218] sm:$0xff]
    %v117 = vld [vmem:[#allocation5 + $0x220] sm:$0xff]
    %v118 = vld [vmem:[#allocation5 + $0x228] sm:$0xff]
    %v119 = vld [vmem:[#allocation5 + $0x230] sm:$0xff]
    %v120 = vld [vmem:[#allocation5 + $0x238] sm:$0xff]
    %v121 = vld [vmem:[#allocation5 + $0x240] sm:$0xff]
    %v122 = vld [vmem:[#allocation5 + $0x248] sm:$0xff]
    %v123 = vld [vmem:[#allocation5 + $0x250] sm:$0xff]
    %v124 = vld [vmem:[#allocation5 + $0x258] sm:$0xff]
    %v125 = vld [vmem:[#allocation5 + $0x260] sm:$0xff]
    %v126 = vld [vmem:[#allocation5 + $0x268] sm:$0xff]
    %v127 = vld [vmem:[#allocation5 + $0x270] sm:$0xff]
    %v128 = vld [vmem:[#allocation5 + $0x278] sm:$0xff]
    %v129 = vld [vmem:[#allocation5 + $0x280] sm:$0xff]
    %v130 = vld [vmem:[#allocation5 + $0x288] sm:$0xff]
    %v131 = vld [vmem:[#allocation5 + $0x290] sm:$0xff]
    %v132 = vld [vmem:[#allocation5 + $0x298] sm:$0xff]
    %v133 = vld [vmem:[#allocation5 + $0x2a0] sm:$0xff]
    %v134 = vld [vmem:[#allocation5 + $0x2a8] sm:$0xff]
    %v135 = vld [vmem:[#allocation5 + $0x2b0] sm:$0xff]
    %v136 = vld [vmem:[#allocation5 + $0x2b8] sm:$0xff]
    %v137 = vld [vmem:[#allocation5 + $0x2c0] sm:$0xff]
    %v138 = vld [vmem:[#allocation5 + $0x2c8] sm:$0xff]
    %v139 = vld [vmem:[#allocation5 + $0x2d0] sm:$0xff]
    %v140 = vld [vmem:[#allocation5 + $0x2d8] sm:$0xff]
    %v141 = vld [vmem:[#allocation5 + $0x2e0] sm:$0xff]
    %v142 = vld [vmem:[#allocation5 + $0x2e8] sm:$0xff]
    %v143 = vld [vmem:[#allocation5 + $0x2f0] sm:$0xff]
    %v144 = vld [vmem:[#allocation5 + $0x2f8] sm:$0xff]
    %v145 = vld [vmem:[#allocation5 + $0x300] sm:$0xff]
    %v146 = vld [vmem:[#allocation5 + $0x308] sm:$0xff]
    %v147 = vld [vmem:[#allocation5 + $0x310] sm:$0xff]
    %v148 = vld [vmem:[#allocation5 + $0x318] sm:$0xff]
    %v149 = vld [vmem:[#allocation5 + $0x320] sm:$0xff]
    %v150 = vld [vmem:[#allocation5 + $0x328] sm:$0xff]
    %v151 = vld [vmem:[#allocation5 + $0x330] sm:$0xff]
    %v152 = vld [vmem:[#allocation5 + $0x338] sm:$0xff]
    %v153 = vld [vmem:[#allocation5 + $0x340] sm:$0xff]
    %v154 = vld [vmem:[#allocation5 + $0x348] sm:$0xff]
    %v155 = vld [vmem:[#allocation5 + $0x350] sm:$0xff]
    %v156 = vld [vmem:[#allocation5 + $0x358] sm:$0xff]
    %v157 = vld [vmem:[#allocation5 + $0x360] sm:$0xff]
    %v158 = vld [vmem:[#allocation5 + $0x368] sm:$0xff]
    %v159 = vld [vmem:[#allocation5 + $0x370] sm:$0xff]
    %v160 = vld [vmem:[#allocation5 + $0x378] sm:$0xff]
    %v161 = vld [vmem:[#allocation5 + $0x380] sm:$0xff]
    %v162 = vld [vmem:[#allocation5 + $0x388] sm:$0xff]
    %v163 = vld [vmem:[#allocation5 + $0x390] sm:$0xff]
    %v164 = vld [vmem:[#allocation5 + $0x398] sm:$0xff]
    %v165 = vld [vmem:[#allocation5 + $0x3a0] sm:$0xff]
    %v166 = vld [vmem:[#allocation5 + $0x3a8] sm:$0xff]
    %v167 = vld [vmem:[#allocation5 + $0x3b0] sm:$0xff]
    %v168 = vld [vmem:[#allocation5 + $0x3b8] sm:$0xff]
    %v169 = vld [vmem:[#allocation5 + $0x3c0] sm:$0xff]
    %v170 = vld [vmem:[#allocation5 + $0x3c8] sm:$0xff]
    %v171 = vld [vmem:[#allocation5 + $0x3d0] sm:$0xff]
    %v172 = vld [vmem:[#allocation5 + $0x3d8] sm:$0xff]
    %v173 = vld [vmem:[#allocation5 + $0x3e0] sm:$0xff]
    %v174 = vld [vmem:[#allocation5 + $0x3e8] sm:$0xff]
    %v175 = vld [vmem:[#allocation5 + $0x3f0] sm:$0xff]
    %v176 = vld [vmem:[#allocation5 + $0x3f8] sm:$0xff]
    %v177 = vld [vmem:[%s2] sm:$0xf]
    %v179 = vlaneseq
    %v180 = vshrl.u32 %v179, 7
    %v181 = vsub.s32 0, %v180
    %v182 = vrot.slane %v177, %v181
    %v183 = vlaneseq
    %v184 = vshrl.u32 %v183, 7
    %v185 = vsub.s32 1, %v184
    %v186 = vrot.slane %v177, %v185
    %v187 = vlaneseq
    %v188 = vshrl.u32 %v187, 7
    %v189 = vsub.s32 2, %v188
    %v190 = vrot.slane %v177, %v189
    %v191 = vlaneseq
    %v192 = vshrl.u32 %v191, 7
    %v193 = vsub.s32 3, %v192
    %v194 = vrot.slane %v177, %v193
    %199 = vmatprep.subr.mxu0 %v50
    %200 = vmatpush1.msra.mxu0 %v49
    %201 = vmatprep.subr.mxu0 %v54
    %202 = vmatpush1.msra.mxu0 %v53
    %203 = vmatprep.subr.mxu0 %v58
    %204 = vmatpush1.msra.mxu0 %v57
    %205 = vmatprep.subr.mxu0 %v62
    %206 = vmatpush1.msra.mxu0 %v61
    %207 = vmatprep.subr.mxu0 %v66
    %208 = vmatpush1.msra.mxu0 %v65
    %209 = vmatprep.subr.mxu0 %v70
    %210 = vmatpush1.msra.mxu0 %v69
    %211 = vmatprep.subr.mxu0 %v74
    %212 = vmatpush1.msra.mxu0 %v73
    %213 = vmatprep.subr.mxu0 %v78
    %214 = vmatpush1.msra.mxu0 %v77
    %215 = vmatprep.subr.mxu0 %v82
    %216 = vmatpush1.msra.mxu0 %v81
    %217 = vmatprep.subr.mxu0 %v86
    %218 = vmatpush1.msra.mxu0 %v85
    %219 = vmatprep.subr.mxu0 %v90
    %220 = vmatpush1.msra.mxu0 %v89
    %221 = vmatprep.subr.mxu0 %v94
    %222 = vmatpush1.msra.mxu0 %v93
    %223 = vmatprep.subr.mxu0 %v98
    %224 = vmatpush1.msra.mxu0 %v97
    %225 = vmatprep.subr.mxu0 %v102
    %226 = vmatpush1.msra.mxu0 %v101
    %227 = vmatprep.subr.mxu0 %v106
    %228 = vmatpush1.msra.mxu0 %v105
    %229 = vmatprep.subr.mxu0 %v110
    %230 = vmatpush1.msra.mxu0 %v109
    %231 = vmatprep.subr.mxu0 %v114
    %232 = vmatpush1.msra.mxu0 %v113
    %233 = vmatprep.subr.mxu0 %v118
    %234 = vmatpush1.msra.mxu0 %v117
    %235 = vmatprep.subr.mxu0 %v122
    %236 = vmatpush1.msra.mxu0 %v121
    %237 = vmatprep.subr.mxu0 %v126
    %238 = vmatpush1.msra.mxu0 %v125
    %239 = vmatprep.subr.mxu0 %v130
    %240 = vmatpush1.msra.mxu0 %v129
    %241 = vmatprep.subr.mxu0 %v134
    %242 = vmatpush1.msra.mxu0 %v133
    %243 = vmatprep.subr.mxu0 %v138
    %244 = vmatpush1.msra.mxu0 %v137
    %245 = vmatprep.subr.mxu0 %v142
    %246 = vmatpush1.msra.mxu0 %v141
    %247 = vmatprep.subr.mxu0 %v146
    %248 = vmatpush1.msra.mxu0 %v145
    %249 = vmatprep.subr.mxu0 %v150
    %250 = vmatpush1.msra.mxu0 %v149
    %251 = vmatprep.subr.mxu0 %v154
    %252 = vmatpush1.msra.mxu0 %v153
    %253 = vmatprep.subr.mxu0 %v158
    %254 = vmatpush1.msra.mxu0 %v157
    %255 = vmatprep.subr.mxu0 %v162
    %256 = vmatpush1.msra.mxu0 %v161
    %257 = vmatprep.subr.mxu0 %v166
    %258 = vmatpush1.msra.mxu0 %v165
    %259 = vmatprep.subr.mxu0 %v170
    %260 = vmatpush1.msra.mxu0 %v169
    %261 = vmatprep.subr.mxu0 %v174
    %262 = vmatpush1.msra.mxu0 %v173
    %263 = vmatprep.mubr.f32.mxu0 %v48
    %264 = vmatmul.mubr.f32.gmra.mrb[0].mxu0 %v47
    %v265 = vpop.f32.mrb[0].mxu0
    %v266 = vadd.f32 %v182, %v265
    %v267 = vpop.f32.mrb[0].mxu0
    %v268 = vadd.f32 %v186, %v267
    %269 = vdwg.mxu0
    %270 = vmatprep.subr.mxu0 %v52
    %271 = vmatpush1.msra.mxu0 %v51
    %272 = vmatprep.subr.mxu0 %v56
    %273 = vmatpush1.msra.mxu0 %v55
    %274 = vmatprep.subr.mxu0 %v60
    %275 = vmatpush1.msra.mxu0 %v59
    %276 = vmatprep.subr.mxu0 %v64
    %277 = vmatpush1.msra.mxu0 %v63
    %278 = vmatprep.subr.mxu0 %v68
    %279 = vmatpush1.msra.mxu0 %v67
    %280 = vmatprep.subr.mxu0 %v72
    %281 = vmatpush1.msra.mxu0 %v71
    %282 = vmatprep.subr.mxu0 %v76
    %283 = vmatpush1.msra.mxu0 %v75
    %284 = vmatprep.subr.mxu0 %v80
    %285 = vmatpush1.msra.mxu0 %v79
    %286 = vmatprep.subr.mxu0 %v84
    %287 = vmatpush1.msra.mxu0 %v83
    %288 = vmatprep.subr.mxu0 %v88
    %289 = vmatpush1.msra.mxu0 %v87
    %290 = vmatprep.subr.mxu0 %v92
    %291 = vmatpush1.msra.mxu0 %v91
    %292 = vmatprep.subr.mxu0 %v96
    %293 = vmatpush1.msra.mxu0 %v95
    %294 = vmatprep.subr.mxu0 %v100
    %295 = vmatpush1.msra.mxu0 %v99
    %296 = vmatprep.subr.mxu0 %v104
    %297 = vmatpush1.msra.mxu0 %v103
    %298 = vmatprep.subr.mxu0 %v108
    %299 = vmatpush1.msra.mxu0 %v107
    %300 = vmatprep.subr.mxu0 %v112
    %301 = vmatpush1.msra.mxu0 %v111
    %302 = vmatprep.subr.mxu0 %v116
    %303 = vmatpush1.msra.mxu0 %v115
    %304 = vmatprep.subr.mxu0 %v120
    %305 = vmatpush1.msra.mxu0 %v119
    %306 = vmatprep.subr.mxu0 %v124
    %307 = vmatpush1.msra.mxu0 %v123
    %308 = vmatprep.subr.mxu0 %v128
    %309 = vmatpush1.msra.mxu0 %v127
    %310 = vmatprep.subr.mxu0 %v132
    %311 = vmatpush1.msra.mxu0 %v131
    %312 = vmatprep.subr.mxu0 %v136
    %313 = vmatpush1.msra.mxu0 %v135
    %314 = vmatprep.subr.mxu0 %v140
    %315 = vmatpush1.msra.mxu0 %v139
    %316 = vmatprep.subr.mxu0 %v144
    %317 = vmatpush1.msra.mxu0 %v143
    %318 = vmatprep.subr.mxu0 %v148
    %319 = vmatpush1.msra.mxu0 %v147
    %320 = vmatprep.subr.mxu0 %v152
    %321 = vmatpush1.msra.mxu0 %v151
    %322 = vmatprep.subr.mxu0 %v156
    %323 = vmatpush1.msra.mxu0 %v155
    %324 = vmatprep.subr.mxu0 %v160
    %325 = vmatpush1.msra.mxu0 %v159
    %326 = vmatprep.subr.mxu0 %v164
    %327 = vmatpush1.msra.mxu0 %v163
    %328 = vmatprep.subr.mxu0 %v168
    %329 = vmatpush1.msra.mxu0 %v167
    %330 = vmatprep.subr.mxu0 %v172
    %331 = vmatpush1.msra.mxu0 %v171
    %332 = vmatprep.subr.mxu0 %v176
    %333 = vmatpush1.msra.mxu0 %v175
    %334 = vmatprep.mubr.f32.mxu0 %v48
    %335 = vmatmul.mubr.f32.gmra.mrb[0].mxu0 %v47
    %v336 = vpop.f32.mrb[0].mxu0
    %v337 = vadd.f32 %v190, %v336
    %v338 = vpop.f32.mrb[0].mxu0
    %v339 = vadd.f32 %v194, %v338
    %340 = vdwg.mxu0
    %v341 = vld [vmem:[%s3] sm:$0x1]
    %v342 = vld [vmem:[%s4] sm:$0x1]
    %343 = vadd.xlane.f32.xlu0 %v266
    %v344 = vpop.xlane.xlu0 %343
    %v345 = vrcp.pop 128.0
    %v346 = vmul.f32 %v344, %v345
    %v347 = vsub.f32 %v266, %v346
    %v348 = vmul.f32 %v347, %v347
    %349 = vadd.xlane.f32.xlu0 %v348
    %v350 = vpop.xlane.xlu0 %349
    %v351 = vmul.f32 %v350, %v345
    %v352 = vadd.f32 %v351, 1e-05
    %v353 = vrsqrt.pop %v352
    %v354 = vmul.f32 %v347, %v353
    %v356 = vlaneseq
    %v357 = vshrl.u32 %v356, 7
    %v358 = vsub.s32 0, %v357
    %v359 = vrot.slane %v341, %v358
    %v361 = vmul.f32 %v354, %v359
    %v363 = vlaneseq
    %v364 = vshrl.u32 %v363, 7
    %v365 = vsub.s32 0, %v364
    %v366 = vrot.slane %v342, %v365
    %v368 = vadd.f32 %v361, %v366
    %369 = vst [vmem:[#allocation7] sm:$0xff] %v368
    %370 = vadd.xlane.f32.xlu0 %v268
    %v371 = vpop.xlane.xlu0 %370
    %v372 = vmul.f32 %v371, %v345
    %v373 = vsub.f32 %v268, %v372
    %v374 = vmul.f32 %v373, %v373
    %375 = vadd.xlane.f32.xlu0 %v374
    %v376 = vpop.xlane.xlu0 %375
    %v377 = vmul.f32 %v376, %v345
    %v378 = vadd.f32 %v377, 1e-05
    %v379 = vrsqrt.pop %v378
    %v380 = vmul.f32 %v373, %v379
    %v381 = vmul.f32 %v380, %v359
    %v382 = vadd.f32 %v381, %v366
    %383 = vst [vmem:[#allocation7 + $0x8] sm:$0xff] %v382
    %384 = vadd.xlane.f32.xlu0 %v337
    %v385 = vpop.xlane.xlu0 %384
    %v386 = vmul.f32 %v385, %v345
    %v387 = vsub.f32 %v337, %v386
    %v388 = vmul.f32 %v387, %v387
    %389 = vadd.xlane.f32.xlu0 %v388
    %v390 = vpop.xlane.xlu0 %389
    %v391 = vmul.f32 %v390, %v345
    %v392 = vadd.f32 %v391, 1e-05
    %v393 = vrsqrt.pop %v392
    %v394 = vmul.f32 %v387, %v393
    %v395 = vmul.f32 %v394, %v359
    %v396 = vadd.f32 %v395, %v366
    %397 = vst [vmem:[#allocation7 + $0x10] sm:$0xff] %v396
    %398 = vadd.xlane.f32.xlu0 %v339
    %v399 = vpop.xlane.xlu0 %398
    %v400 = vmul.f32 %v399, %v345
    %v401 = vsub.f32 %v339, %v400
    %v402 = vmul.f32 %v401, %v401
    %403 = vadd.xlane.f32.xlu0 %v402
    %v404 = vpop.xlane.xlu0 %403
    %v405 = vmul.f32 %v404, %v345
    %v406 = vadd.f32 %v405, 1e-05
    %v407 = vrsqrt.pop %v406
    %v408 = vmul.f32 %v401, %v407
    %v409 = vmul.f32 %v408, %v359
    %v410 = vadd.f32 %v409, %v366
    %411 = vst [vmem:[#allocation7 + $0x18] sm:$0xff] %v410
    // Predicated region
    $region30: #{tpu_custom_call.1} parent=1 // pred_check
      _
    $region31: #{tpu_custom_call.1} parent=1 // pred_check_branch
      %413 = sbr.rel (0) target = $region33
    $region32: #{tpu_custom_call.1} parent=1 // pred_region
      %s415 = ssub.s32 512, 512
      %416 = vsyncadd [#allocation4], %s415
      %s418 = sshll.u32 [#allocation7], 4
      %s419 = int_to_ptr.vmem [resolvable:$true] %s418
      %421 = dma.vmem_to_hbm [thread:$0]  %s419, 512, %s5, [#allocation4]
    $region33: #{tpu_custom_call.1} parent=1 // pred_fallthru
      _
    // Predicated region
    $region34: #{tpu_custom_call.1} parent=1 // pred_check
      _
    $region35: #{tpu_custom_call.1} parent=1 // pred_check_branch
      %423 = sbr.rel (0) target = $region37
    $region36: #{tpu_custom_call.1} parent=1 // pred_region
      %424 = dma.done [#allocation4], 512
    $region37: #{tpu_custom_call.1} parent=1 // pred_fallthru
      _
    %425 = vsyncpa [#allocation3], 1
    %426 = vsyncpa [#allocation6], 1
    %427 = vsyncpa [#allocation4], 1

// kernel: tpu_custom_call.1
$region0: #{tpu_custom_call.1}
  #allocation0 [shape = 'u32[]', space=smem, size = 0x4, offset = 0x4, fixed_abs, tag = 'smem constant byte address 0x4 - core index']
  #allocation1 [shape = 'u32[144,128]{1,0:T(1,128)}', space=vmem, size = 0x12000, scoped, tag = 'internal scratch']
  %s0 = inlined_call_operand.hbm [shape: f32[8,256], index: 0, kind: input, shape index: {}]
  %s1 = inlined_call_operand.hbm [shape: f32[256,512], index: 1, kind: input, shape index: {}]
  %s2 = inlined_call_operand.vmem [shape: f32[1,512], index: 2, kind: input, shape index: {}]
  %s3 = inlined_call_operand.vmem [shape: f32[1,128], index: 3, kind: input, shape index: {}]
  %s4 = inlined_call_operand.vmem [shape: f32[1,128], index: 4, kind: input, shape index: {}]
  %s5 = inlined_call_operand.hbm [shape: f32[8,512], index: 5, kind: output, shape index: {}]
  %s6 = sld [smem:[#allocation0]]
  $region38: #{tpu_custom_call.1} parent=0
    _
  %s8 = ssub.s32 1, %s6
  %s9 = scalar_select 0, %s8, %s6
  $region1: #{tpu_custom_call.1} parent=0
    #allocation2 [shape = 'u8[8192]{0}', space=vmem, size = 0x2000, scoped, tag = 'input window, operand 0, single buffered']
    #allocation3 [shape = 's32[1]{0}', space=sflag, size = 0x4, scoped, tag = 'scoped memory for tpu_custom_call.1']
    #allocation4 [shape = 's32[1]{0}', space=sflag, size = 0x4, scoped, tag = 'scoped memory for tpu_custom_call.1']
    #allocation5 [shape = 'u8[524288]{0}', space=vmem, size = 0x80000, scoped, tag = 'input window, operand 1, single buffered']
    #allocation6 [shape = 's32[1]{0}', space=sflag, size = 0x4, scoped, tag = 'scoped memory for tpu_custom_call.1']
    #allocation7 [shape = 'u8[16384]{0}', space=vmem, size = 0x4000, scoped, tag = 'output window, operand 0, single buffered']
    %10 = vsyncpa [#allocation3], 0
    %11 = vsyncpa [#allocation6], 0
    %12 = vsyncpa [#allocation4], 0
    // Predicated region
    $region2: #{tpu_custom_call.1} parent=1 // pred_check
      _
    $region3: #{tpu_custom_call.1} parent=1 // pred_check_branch
      %14 = sbr.rel (0) target = $region5
    $region4: #{tpu_custom_call.1} parent=1 // pred_region
      %s16 = ssub.s32 256, 256
      %17 = vsyncadd [#allocation3], %s16
      %s19 = sshll.u32 [#allocation2], 4
      %s20 = int_to_ptr.vmem [resolvable:$true] %s19
      %22 = dma.hbm_to_vmem [thread:$0]  %s0, 256, %s20, [#allocation3]
    $region5: #{tpu_custom_call.1} parent=1 // pred_fallthru
      _
    // Predicated region
    $region6: #{tpu_custom_call.1} parent=1 // pred_check
      _
    $region7: #{tpu_custom_call.1} parent=1 // pred_check_branch
      %24 = sbr.rel (0) target = $region9
    $region8: #{tpu_custom_call.1} parent=1 // pred_region
      %s26 = ssub.s32 16384, 16384
      %27 = vsyncadd [#allocation6], %s26
      %s28 = sshll.u32 [#allocation5], 4
      %s29 = int_to_ptr.vmem [resolvable:$true] %s28
      %34 = dma.hbm_to_vmem [thread:$0]  %s1, 16384, %s29, [#allocation6], 512, 512, 32
    $region9: #{tpu_custom_call.1} parent=1 // pred_fallthru
      _
    // Predicated region
    $region10: #{tpu_custom_call.1} parent=1 // pred_check
      _
    $region11: #{tpu_custom_call.1} parent=1 // pred_check_branch
      %36 = sbr.rel (0) target = $region13
    $region12: #{tpu_custom_call.1} parent=1 // pred_region
      _
    $region13: #{tpu_custom_call.1} parent=1 // pred_fallthru
      _
    // Predicated region
    $region14: #{tpu_custom_call.1} parent=1 // pred_check
      _
    $region15: #{tpu_custom_call.1} parent=1 // pred_check_branch
      %38 = sbr.rel (0) target = $region17
    $region16: #{tpu_custom_call.1} parent=1 // pred_region
      _
    $region17: #{tpu_custom_call.1} parent=1 // pred_fallthru
      _
    // Predicated region
    $region18: #{tpu_custom_call.1} parent=1 // pred_check
      _
    $region19: #{tpu_custom_call.1} parent=1 // pred_check_branch
      %40 = sbr.rel (0) target = $region21
    $region20: #{tpu_custom_call.1} parent=1 // pred_region
      _
    $region21: #{tpu_custom_call.1} parent=1 // pred_fallthru
      _
    // Predicated region
    $region22: #{tpu_custom_call.1} parent=1 // pred_check
      _
    $region23: #{tpu_custom_call.1} parent=1 // pred_check_branch
      %42 = sbr.rel (0) target = $region25
    $region24: #{tpu_custom_call.1} parent=1 // pred_region
      %43 = dma.done [#allocation3], 256
    $region25: #{tpu_custom_call.1} parent=1 // pred_fallthru
      _
    // Predicated region
    $region26: #{tpu_custom_call.1} parent=1 // pred_check
      _
    $region27: #{tpu_custom_call.1} parent=1 // pred_check_branch
      %45 = sbr.rel (0) target = $region29
    $region28: #{tpu_custom_call.1} parent=1 // pred_region
      %46 = dma.done [#allocation6], 16384
    $region29: #{tpu_custom_call.1} parent=1 // pred_fallthru
      _
    %v47 = vld [vmem:[#allocation2] sm:$0xff]
    %v48 = vld [vmem:[#allocation2 + $0x8] sm:$0xff]
    %v49 = vld [vmem:[#allocation5] sm:$0xff]
    %v50 = vld [vmem:[#allocation5 + $0x8] sm:$0xff]
    %v51 = vld [vmem:[#allocation5 + $0x10] sm:$0xff]
    %v52 = vld [vmem:[#allocation5 + $0x18] sm:$0xff]
    %v53 = vld [vmem:[#allocation5 + $0x20] sm:$0xff]
    %v54 = vld [vmem:[#allocation5 + $0x28] sm:$0xff]
    %v55 = vld [vmem:[#allocation5 + $0x30] sm:$0xff]
    %v56 = vld [vmem:[#allocation5 + $0x38] sm:$0xff]
    %v57 = vld [vmem:[#allocation5 + $0x40] sm:$0xff]
    %v58 = vld [vmem:[#allocation5 + $0x48] sm:$0xff]
    %v59 = vld [vmem:[#allocation5 + $0x50] sm:$0xff]
    %v60 = vld [vmem:[#allocation5 + $0x58] sm:$0xff]
    %v61 = vld [vmem:[#allocation5 + $0x60] sm:$0xff]
    %v62 = vld [vmem:[#allocation5 + $0x68] sm:$0xff]
    %v63 = vld [vmem:[#allocation5 + $0x70] sm:$0xff]
    %v64 = vld [vmem:[#allocation5 + $0x78] sm:$0xff]
    %v65 = vld [vmem:[#allocation5 + $0x80] sm:$0xff]
    %v66 = vld [vmem:[#allocation5 + $0x88] sm:$0xff]
    %v67 = vld [vmem:[#allocation5 + $0x90] sm:$0xff]
    %v68 = vld [vmem:[#allocation5 + $0x98] sm:$0xff]
    %v69 = vld [vmem:[#allocation5 + $0xa0] sm:$0xff]
    %v70 = vld [vmem:[#allocation5 + $0xa8] sm:$0xff]
    %v71 = vld [vmem:[#allocation5 + $0xb0] sm:$0xff]
    %v72 = vld [vmem:[#allocation5 + $0xb8] sm:$0xff]
    %v73 = vld [vmem:[#allocation5 + $0xc0] sm:$0xff]
    %v74 = vld [vmem:[#allocation5 + $0xc8] sm:$0xff]
    %v75 = vld [vmem:[#allocation5 + $0xd0] sm:$0xff]
    %v76 = vld [vmem:[#allocation5 + $0xd8] sm:$0xff]
    %v77 = vld [vmem:[#allocation5 + $0xe0] sm:$0xff]
    %v78 = vld [vmem:[#allocation5 + $0xe8] sm:$0xff]
    %v79 = vld [vmem:[#allocation5 + $0xf0] sm:$0xff]
    %v80 = vld [vmem:[#allocation5 + $0xf8] sm:$0xff]
    %v81 = vld [vmem:[#allocation5 + $0x100] sm:$0xff]
    %v82 = vld [vmem:[#allocation5 + $0x108] sm:$0xff]
    %v83 = vld [vmem:[#allocation5 + $0x110] sm:$0xff]
    %v84 = vld [vmem:[#allocation5 + $0x118] sm:$0xff]
    %v85 = vld [vmem:[#allocation5 + $0x120] sm:$0xff]
    %v86 = vld [vmem:[#allocation5 + $0x128] sm:$0xff]
    %v87 = vld [vmem:[#allocation5 + $0x130] sm:$0xff]
    %v88 = vld [vmem:[#allocation5 + $0x138] sm:$0xff]
    %v89 = vld [vmem:[#allocation5 + $0x140] sm:$0xff]
    %v90 = vld [vmem:[#allocation5 + $0x148] sm:$0xff]
    %v91 = vld [vmem:[#allocation5 + $0x150] sm:$0xff]
    %v92 = vld [vmem:[#allocation5 + $0x158] sm:$0xff]
    %v93 = vld [vmem:[#allocation5 + $0x160] sm:$0xff]
    %v94 = vld [vmem:[#allocation5 + $0x168] sm:$0xff]
    %v95 = vld [vmem:[#allocation5 + $0x170] sm:$0xff]
    %v96 = vld [vmem:[#allocation5 + $0x178] sm:$0xff]
    %v97 = vld [vmem:[#allocation5 + $0x180] sm:$0xff]
    %v98 = vld [vmem:[#allocation5 + $0x188] sm:$0xff]
    %v99 = vld [vmem:[#allocation5 + $0x190] sm:$0xff]
    %v100 = vld [vmem:[#allocation5 + $0x198] sm:$0xff]
    %v101 = vld [vmem:[#allocation5 + $0x1a0] sm:$0xff]
    %v102 = vld [vmem:[#allocation5 + $0x1a8] sm:$0xff]
    %v103 = vld [vmem:[#allocation5 + $0x1b0] sm:$0xff]
    %v104 = vld [vmem:[#allocation5 + $0x1b8] sm:$0xff]
    %v105 = vld [vmem:[#allocation5 + $0x1c0] sm:$0xff]
    %v106 = vld [vmem:[#allocation5 + $0x1c8] sm:$0xff]
    %v107 = vld [vmem:[#allocation5 + $0x1d0] sm:$0xff]
    %v108 = vld [vmem:[#allocation5 + $0x1d8] sm:$0xff]
    %v109 = vld [vmem:[#allocation5 + $0x1e0] sm:$0xff]
    %v110 = vld [vmem:[#allocation5 + $0x1e8] sm:$0xff]
    %v111 = vld [vmem:[#allocation5 + $0x1f0] sm:$0xff]
    %v112 = vld [vmem:[#allocation5 + $0x1f8] sm:$0xff]
    %v113 = vld [vmem:[#allocation5 + $0x200] sm:$0xff]
    %v114 = vld [vmem:[#allocation5 + $0x208] sm:$0xff]
    %v115 = vld [vmem:[#allocation5 + $0x210] sm:$0xff]
    %v116 = vld [vmem:[#allocation5 + $0x218] sm:$0xff]
    %v117 = vld [vmem:[#allocation5 + $0x220] sm:$0xff]
    %v118 = vld [vmem:[#allocation5 + $0x228] sm:$0xff]
    %v119 = vld [vmem:[#allocation5 + $0x230] sm:$0xff]
    %v120 = vld [vmem:[#allocation5 + $0x238] sm:$0xff]
    %v121 = vld [vmem:[#allocation5 + $0x240] sm:$0xff]
    %v122 = vld [vmem:[#allocation5 + $0x248] sm:$0xff]
    %v123 = vld [vmem:[#allocation5 + $0x250] sm:$0xff]
    %v124 = vld [vmem:[#allocation5 + $0x258] sm:$0xff]
    %v125 = vld [vmem:[#allocation5 + $0x260] sm:$0xff]
    %v126 = vld [vmem:[#allocation5 + $0x268] sm:$0xff]
    %v127 = vld [vmem:[#allocation5 + $0x270] sm:$0xff]
    %v128 = vld [vmem:[#allocation5 + $0x278] sm:$0xff]
    %v129 = vld [vmem:[#allocation5 + $0x280] sm:$0xff]
    %v130 = vld [vmem:[#allocation5 + $0x288] sm:$0xff]
    %v131 = vld [vmem:[#allocation5 + $0x290] sm:$0xff]
    %v132 = vld [vmem:[#allocation5 + $0x298] sm:$0xff]
    %v133 = vld [vmem:[#allocation5 + $0x2a0] sm:$0xff]
    %v134 = vld [vmem:[#allocation5 + $0x2a8] sm:$0xff]
    %v135 = vld [vmem:[#allocation5 + $0x2b0] sm:$0xff]
    %v136 = vld [vmem:[#allocation5 + $0x2b8] sm:$0xff]
    %v137 = vld [vmem:[#allocation5 + $0x2c0] sm:$0xff]
    %v138 = vld [vmem:[#allocation5 + $0x2c8] sm:$0xff]
    %v139 = vld [vmem:[#allocation5 + $0x2d0] sm:$0xff]
    %v140 = vld [vmem:[#allocation5 + $0x2d8] sm:$0xff]
    %v141 = vld [vmem:[#allocation5 + $0x2e0] sm:$0xff]
    %v142 = vld [vmem:[#allocation5 + $0x2e8] sm:$0xff]
    %v143 = vld [vmem:[#allocation5 + $0x2f0] sm:$0xff]
    %v144 = vld [vmem:[#allocation5 + $0x2f8] sm:$0xff]
    %v145 = vld [vmem:[#allocation5 + $0x300] sm:$0xff]
    %v146 = vld [vmem:[#allocation5 + $0x308] sm:$0xff]
    %v147 = vld [vmem:[#allocation5 + $0x310] sm:$0xff]
    %v148 = vld [vmem:[#allocation5 + $0x318] sm:$0xff]
    %v149 = vld [vmem:[#allocation5 + $0x320] sm:$0xff]
    %v150 = vld [vmem:[#allocation5 + $0x328] sm:$0xff]
    %v151 = vld [vmem:[#allocation5 + $0x330] sm:$0xff]
    %v152 = vld [vmem:[#allocation5 + $0x338] sm:$0xff]
    %v153 = vld [vmem:[#allocation5 + $0x340] sm:$0xff]
    %v154 = vld [vmem:[#allocation5 + $0x348] sm:$0xff]
    %v155 = vld [vmem:[#allocation5 + $0x350] sm:$0xff]
    %v156 = vld [vmem:[#allocation5 + $0x358] sm:$0xff]
    %v157 = vld [vmem:[#allocation5 + $0x360] sm:$0xff]
    %v158 = vld [vmem:[#allocation5 + $0x368] sm:$0xff]
    %v159 = vld [vmem:[#allocation5 + $0x370] sm:$0xff]
    %v160 = vld [vmem:[#allocation5 + $0x378] sm:$0xff]
    %v161 = vld [vmem:[#allocation5 + $0x380] sm:$0xff]
    %v162 = vld [vmem:[#allocation5 + $0x388] sm:$0xff]
    %v163 = vld [vmem:[#allocation5 + $0x390] sm:$0xff]
    %v164 = vld [vmem:[#allocation5 + $0x398] sm:$0xff]
    %v165 = vld [vmem:[#allocation5 + $0x3a0] sm:$0xff]
    %v166 = vld [vmem:[#allocation5 + $0x3a8] sm:$0xff]
    %v167 = vld [vmem:[#allocation5 + $0x3b0] sm:$0xff]
    %v168 = vld [vmem:[#allocation5 + $0x3b8] sm:$0xff]
    %v169 = vld [vmem:[#allocation5 + $0x3c0] sm:$0xff]
    %v170 = vld [vmem:[#allocation5 + $0x3c8] sm:$0xff]
    %v171 = vld [vmem:[#allocation5 + $0x3d0] sm:$0xff]
    %v172 = vld [vmem:[#allocation5 + $0x3d8] sm:$0xff]
    %v173 = vld [vmem:[#allocation5 + $0x3e0] sm:$0xff]
    %v174 = vld [vmem:[#allocation5 + $0x3e8] sm:$0xff]
    %v175 = vld [vmem:[#allocation5 + $0x3f0] sm:$0xff]
    %v176 = vld [vmem:[#allocation5 + $0x3f8] sm:$0xff]
    %v177 = vld [vmem:[%s2] sm:$0xf]
    %v179 = vlaneseq
    %v180 = vshrl.u32 %v179, 7
    %v181 = vsub.s32 0, %v180
    %v182 = vrot.slane %v177, %v181
    %v183 = vlaneseq
    %v184 = vshrl.u32 %v183, 7
    %v185 = vsub.s32 1, %v184
    %v186 = vrot.slane %v177, %v185
    %v187 = vlaneseq
    %v188 = vshrl.u32 %v187, 7
    %v189 = vsub.s32 2, %v188
    %v190 = vrot.slane %v177, %v189
    %v191 = vlaneseq
    %v192 = vshrl.u32 %v191, 7
    %v193 = vsub.s32 3, %v192
    %v194 = vrot.slane %v177, %v193
    %199 = vmatprep.subr.mxu0 %v50
    %200 = vmatpush1.msra.mxu0 %v49
    %201 = vmatprep.subr.mxu0 %v54
    %202 = vmatpush1.msra.mxu0 %v53
    %203 = vmatprep.subr.mxu0 %v58
    %204 = vmatpush1.msra.mxu0 %v57
    %205 = vmatprep.subr.mxu0 %v62
    %206 = vmatpush1.msra.mxu0 %v61
    %207 = vmatprep.subr.mxu0 %v66
    %208 = vmatpush1.msra.mxu0 %v65
    %209 = vmatprep.subr.mxu0 %v70
    %210 = vmatpush1.msra.mxu0 %v69
    %211 = vmatprep.subr.mxu0 %v74
    %212 = vmatpush1.msra.mxu0 %v73
    %213 = vmatprep.subr.mxu0 %v78
    %214 = vmatpush1.msra.mxu0 %v77
    %215 = vmatprep.subr.mxu0 %v82
    %216 = vmatpush1.msra.mxu0 %v81
    %217 = vmatprep.subr.mxu0 %v86
    %218 = vmatpush1.msra.mxu0 %v85
    %219 = vmatprep.subr.mxu0 %v90
    %220 = vmatpush1.msra.mxu0 %v89
    %221 = vmatprep.subr.mxu0 %v94
    %222 = vmatpush1.msra.mxu0 %v93
    %223 = vmatprep.subr.mxu0 %v98
    %224 = vmatpush1.msra.mxu0 %v97
    %225 = vmatprep.subr.mxu0 %v102
    %226 = vmatpush1.msra.mxu0 %v101
    %227 = vmatprep.subr.mxu0 %v106
    %228 = vmatpush1.msra.mxu0 %v105
    %229 = vmatprep.subr.mxu0 %v110
    %230 = vmatpush1.msra.mxu0 %v109
    %231 = vmatprep.subr.mxu0 %v114
    %232 = vmatpush1.msra.mxu0 %v113
    %233 = vmatprep.subr.mxu0 %v118
    %234 = vmatpush1.msra.mxu0 %v117
    %235 = vmatprep.subr.mxu0 %v122
    %236 = vmatpush1.msra.mxu0 %v121
    %237 = vmatprep.subr.mxu0 %v126
    %238 = vmatpush1.msra.mxu0 %v125
    %239 = vmatprep.subr.mxu0 %v130
    %240 = vmatpush1.msra.mxu0 %v129
    %241 = vmatprep.subr.mxu0 %v134
    %242 = vmatpush1.msra.mxu0 %v133
    %243 = vmatprep.subr.mxu0 %v138
    %244 = vmatpush1.msra.mxu0 %v137
    %245 = vmatprep.subr.mxu0 %v142
    %246 = vmatpush1.msra.mxu0 %v141
    %247 = vmatprep.subr.mxu0 %v146
    %248 = vmatpush1.msra.mxu0 %v145
    %249 = vmatprep.subr.mxu0 %v150
    %250 = vmatpush1.msra.mxu0 %v149
    %251 = vmatprep.subr.mxu0 %v154
    %252 = vmatpush1.msra.mxu0 %v153
    %253 = vmatprep.subr.mxu0 %v158
    %254 = vmatpush1.msra.mxu0 %v157
    %255 = vmatprep.subr.mxu0 %v162
    %256 = vmatpush1.msra.mxu0 %v161
    %257 = vmatprep.subr.mxu0 %v166
    %258 = vmatpush1.msra.mxu0 %v165
    %259 = vmatprep.subr.mxu0 %v170
    %260 = vmatpush1.msra.mxu0 %v169
    %261 = vmatprep.subr.mxu0 %v174
    %262 = vmatpush1.msra.mxu0 %v173
    %263 = vmatprep.mubr.f32.mxu0 %v48
    %264 = vmatmul.mubr.f32.gmra.mrb[0].mxu0 %v47
    %v265 = vpop.f32.mrb[0].mxu0
    %v266 = vadd.f32 %v182, %v265
    %v267 = vpop.f32.mrb[0].mxu0
    %v268 = vadd.f32 %v186, %v267
    %269 = vdwg.mxu0
    %270 = vmatprep.subr.mxu0 %v52
    %271 = vmatpush1.msra.mxu0 %v51
    %272 = vmatprep.subr.mxu0 %v56
    %273 = vmatpush1.msra.mxu0 %v55
    %274 = vmatprep.subr.mxu0 %v60
    %275 = vmatpush1.msra.mxu0 %v59
    %276 = vmatprep.subr.mxu0 %v64
    %277 = vmatpush1.msra.mxu0 %v63
    %278 = vmatprep.subr.mxu0 %v68
    %279 = vmatpush1.msra.mxu0 %v67
    %280 = vmatprep.subr.mxu0 %v72
    %281 = vmatpush1.msra.mxu0 %v71
    %282 = vmatprep.subr.mxu0 %v76
    %283 = vmatpush1.msra.mxu0 %v75
    %284 = vmatprep.subr.mxu0 %v80
    %285 = vmatpush1.msra.mxu0 %v79
    %286 = vmatprep.subr.mxu0 %v84
    %287 = vmatpush1.msra.mxu0 %v83
    %288 = vmatprep.subr.mxu0 %v88
    %289 = vmatpush1.msra.mxu0 %v87
    %290 = vmatprep.subr.mxu0 %v92
    %291 = vmatpush1.msra.mxu0 %v91
    %292 = vmatprep.subr.mxu0 %v96
    %293 = vmatpush1.msra.mxu0 %v95
    %294 = vmatprep.subr.mxu0 %v100
    %295 = vmatpush1.msra.mxu0 %v99
    %296 = vmatprep.subr.mxu0 %v104
    %297 = vmatpush1.msra.mxu0 %v103
    %298 = vmatprep.subr.mxu0 %v108
    %299 = vmatpush1.msra.mxu0 %v107
    %300 = vmatprep.subr.mxu0 %v112
    %301 = vmatpush1.msra.mxu0 %v111
    %302 = vmatprep.subr.mxu0 %v116
    %303 = vmatpush1.msra.mxu0 %v115
    %304 = vmatprep.subr.mxu0 %v120
    %305 = vmatpush1.msra.mxu0 %v119
    %306 = vmatprep.subr.mxu0 %v124
    %307 = vmatpush1.msra.mxu0 %v123
    %308 = vmatprep.subr.mxu0 %v128
    %309 = vmatpush1.msra.mxu0 %v127
    %310 = vmatprep.subr.mxu0 %v132
    %311 = vmatpush1.msra.mxu0 %v131
    %312 = vmatprep.subr.mxu0 %v136
    %313 = vmatpush1.msra.mxu0 %v135
    %314 = vmatprep.subr.mxu0 %v140
    %315 = vmatpush1.msra.mxu0 %v139
    %316 = vmatprep.subr.mxu0 %v144
    %317 = vmatpush1.msra.mxu0 %v143
    %318 = vmatprep.subr.mxu0 %v148
    %319 = vmatpush1.msra.mxu0 %v147
    %320 = vmatprep.subr.mxu0 %v152
    %321 = vmatpush1.msra.mxu0 %v151
    %322 = vmatprep.subr.mxu0 %v156
    %323 = vmatpush1.msra.mxu0 %v155
    %324 = vmatprep.subr.mxu0 %v160
    %325 = vmatpush1.msra.mxu0 %v159
    %326 = vmatprep.subr.mxu0 %v164
    %327 = vmatpush1.msra.mxu0 %v163
    %328 = vmatprep.subr.mxu0 %v168
    %329 = vmatpush1.msra.mxu0 %v167
    %330 = vmatprep.subr.mxu0 %v172
    %331 = vmatpush1.msra.mxu0 %v171
    %332 = vmatprep.subr.mxu0 %v176
    %333 = vmatpush1.msra.mxu0 %v175
    %334 = vmatprep.mubr.f32.mxu0 %v48
    %335 = vmatmul.mubr.f32.gmra.mrb[0].mxu0 %v47
    %v336 = vpop.f32.mrb[0].mxu0
    %v337 = vadd.f32 %v190, %v336
    %v338 = vpop.f32.mrb[0].mxu0
    %v339 = vadd.f32 %v194, %v338
    %340 = vdwg.mxu0
    %v341 = vld [vmem:[%s3] sm:$0x1]
    %v342 = vld [vmem:[%s4] sm:$0x1]
    %343 = vadd.xlane.f32.xlu0 %v266
    %v344 = vpop.xlane.xlu0 %343
    %v345 = vrcp.pop 128.0
    %v346 = vmul.f32 %v344, %v345
    %v347 = vsub.f32 %v266, %v346
    %v348 = vmul.f32 %v347, %v347
    %349 = vadd.xlane.f32.xlu0 %v348
    %v350 = vpop.xlane.xlu0 %349
    %v351 = vmul.f32 %v350, %v345
    %v352 = vadd.f32 %v351, 1e-05
    %v353 = vrsqrt.pop %v352
    %v354 = vmul.f32 %v347, %v353
    %v356 = vlaneseq
    %v357 = vshrl.u32 %v356, 7
    %v358 = vsub.s32 0, %v357
    %v359 = vrot.slane %v341, %v358
    %v361 = vmul.f32 %v354, %v359
    %v363 = vlaneseq
    %v364 = vshrl.u32 %v363, 7
    %v365 = vsub.s32 0, %v364
    %v366 = vrot.slane %v342, %v365
    %v368 = vadd.f32 %v361, %v366
    %369 = vst [vmem:[#allocation7] sm:$0xff] %v368
    %370 = vadd.xlane.f32.xlu0 %v268
    %v371 = vpop.xlane.xlu0 %370
    %v372 = vmul.f32 %v371, %v345
    %v373 = vsub.f32 %v268, %v372
    %v374 = vmul.f32 %v373, %v373
    %375 = vadd.xlane.f32.xlu0 %v374
    %v376 = vpop.xlane.xlu0 %375
    %v377 = vmul.f32 %v376, %v345
    %v378 = vadd.f32 %v377, 1e-05
    %v379 = vrsqrt.pop %v378
    %v380 = vmul.f32 %v373, %v379
    %v381 = vmul.f32 %v380, %v359
    %v382 = vadd.f32 %v381, %v366
    %383 = vst [vmem:[#allocation7 + $0x8] sm:$0xff] %v382
    %384 = vadd.xlane.f32.xlu0 %v337
    %v385 = vpop.xlane.xlu0 %384
    %v386 = vmul.f32 %v385, %v345
    %v387 = vsub.f32 %v337, %v386
    %v388 = vmul.f32 %v387, %v387
    %389 = vadd.xlane.f32.xlu0 %v388
    %v390 = vpop.xlane.xlu0 %389
    %v391 = vmul.f32 %v390, %v345
    %v392 = vadd.f32 %v391, 1e-05
    %v393 = vrsqrt.pop %v392
    %v394 = vmul.f32 %v387, %v393
    %v395 = vmul.f32 %v394, %v359
    %v396 = vadd.f32 %v395, %v366
    %397 = vst [vmem:[#allocation7 + $0x10] sm:$0xff] %v396
    %398 = vadd.xlane.f32.xlu0 %v339
    %v399 = vpop.xlane.xlu0 %398
    %v400 = vmul.f32 %v399, %v345
    %v401 = vsub.f32 %v339, %v400
    %v402 = vmul.f32 %v401, %v401
    %403 = vadd.xlane.f32.xlu0 %v402
    %v404 = vpop.xlane.xlu0 %403
    %v405 = vmul.f32 %v404, %v345
    %v406 = vadd.f32 %v405, 1e-05
    %v407 = vrsqrt.pop %v406
    %v408 = vmul.f32 %v401, %v407
    %v409 = vmul.f32 %v408, %v359
    %v410 = vadd.f32 %v409, %v366
    %411 = vst [vmem:[#allocation7 + $0x18] sm:$0xff] %v410
    // Predicated region
    $region30: #{tpu_custom_call.1} parent=1 // pred_check
      _
    $region31: #{tpu_custom_call.1} parent=1 // pred_check_branch
      %413 = sbr.rel (0) target = $region33
    $region32: #{tpu_custom_call.1} parent=1 // pred_region
      %s415 = ssub.s32 512, 512
      %416 = vsyncadd [#allocation4], %s415
      %s418 = sshll.u32 [#allocation7], 4
      %s419 = int_to_ptr.vmem [resolvable:$true] %s418
      %421 = dma.vmem_to_hbm [thread:$0]  %s419, 512, %s5, [#allocation4]
    $region33: #{tpu_custom_call.1} parent=1 // pred_fallthru
      _
    // Predicated region
    $region34: #{tpu_custom_call.1} parent=1 // pred_check
      _
    $region35: #{tpu_custom_call.1} parent=1 // pred_check_branch
      %423 = sbr.rel (0) target = $region37
    $region36: #{tpu_custom_call.1} parent=1 // pred_region
      %424 = dma.done [#allocation4], 512
    $region37: #{tpu_custom_call.1} parent=1 // pred_fallthru
      _
    %425 = vsyncpa [#allocation3], 1
    %426 = vsyncpa [#allocation6], 1
    %427 = vsyncpa [#allocation4], 1

</llo_original>
